<compile_context>
chip_gen: v5e
topology: v5e:2x2
jax: 0.10.0
libtpu: 0.0.40
codegen_flags: <defaults>
</compile_context>

<pallas_src>
import functools

import jax
import jax.numpy as jnp
from jax.experimental import pallas as pl
from jax.experimental.pallas import tpu as pltpu

SUBLANE = 8                   # f32 sublane tile
LANE = 128                    # lane tile
MATMUL_DTYPE = jnp.bfloat16   # MXU operand dtype (f32 accumulation everywhere)


def _round_up(x, m):
    return ((x + m - 1) // m) * m


def _sigmoid(x):
    # sigmoid(x) = 0.5 * (tanh(x / 2) + 1): single EUP transcendental per gate.
    return 0.5 * (jnp.tanh(0.5 * x) + 1.0)


# ----------------------------------------------------------------------------
# Fused sequence kernel: for each t -> encoder, GRU stack, decoder.
# Weights resident in VMEM across all grid steps; hidden state in VMEM scratch.
# ----------------------------------------------------------------------------
def _char_rnn_seq_kernel(tok_ref, emb_ref, w_ref, b_ref, h0_ref,
                         dec_w_ref, dec_b_ref,
                         logits_ref, h_out_ref,
                         h_state):
    t = pl.program_id(0)
    n_layers, Bp, Hp = h0_ref.shape
    V = emb_ref.shape[0]
    mm_dtype = w_ref.dtype

    # Initialize the recurrent state from h0 on the first step only.
    @pl.when(t == 0)
    def _():
        h_state[...] = h0_ref[...]

    # --- encoder: embedding lookup as one-hot @ table (bf16 MXU matmul) -----
    lane_id = jax.lax.broadcasted_iota(jnp.int32, (Bp, V), 1)
    one_hot = jnp.where(lane_id == tok_ref[...], 1.0, 0.0).astype(mm_dtype)
    x = jnp.dot(one_hot, emb_ref[...], preferred_element_type=jnp.float32)

    # --- GRU stack, one time step -------------------------------------------
    # Fused RHS column blocks: [r | z | gi_n | gh_n], each Hp wide.
    for l in range(n_layers):
        h = h_state[l]                                           # (Bp, Hp) f32
        xh = jnp.concatenate([x, h], axis=1).astype(mm_dtype)    # (Bp, 2*Hp)
        g = jnp.dot(xh, w_ref[l],
                    preferred_element_type=jnp.float32) + b_ref[l]
        r = _sigmoid(g[:, 0:Hp])
        z = _sigmoid(g[:, Hp:2 * Hp])
        n = jnp.tanh(g[:, 2 * Hp:3 * Hp] + r * g[:, 3 * Hp:4 * Hp])
        h_new = (1.0 - z) * n + z * h
        h_state[l] = h_new
        x = h_new                                                # next layer input

    # --- decoder: logits_t = x @ W_dec^T + b (W_dec pre-transposed) ---------
    logits_ref[...] = (
        jnp.dot(x.astype(mm_dtype), dec_w_ref[...],
                preferred_element_type=jnp.float32)
        + dec_b_ref[...]
    )

    # Write the final hidden state back only once, at the last step.
    @pl.when(t == pl.num_programs(0) - 1)
    def _():
        h_out_ref[...] = h_state[...]


def _seq_forward(tok_p, h0_p, packed):
    T, Bp, _ = tok_p.shape
    L, _, Hp = h0_p.shape
    Op = packed["dec_w"].shape[1]

    grid_spec = pltpu.PrefetchScalarGridSpec(
        num_scalar_prefetch=0,
        grid=(T,),
        in_specs=[
            # per-step token ids (tiny, pipelined DMA)
            pl.BlockSpec((None, Bp, 1), lambda t: (t, 0, 0)),
            # weights: constant index maps -> DMA'd once, VMEM-resident
            pl.BlockSpec(packed["embedding"].shape, lambda t: (0, 0)),
            pl.BlockSpec(packed["w"].shape, lambda t: (0, 0, 0)),
            pl.BlockSpec(packed["b"].shape, lambda t: (0, 0, 0)),
            pl.BlockSpec(h0_p.shape, lambda t: (0, 0, 0)),
            pl.BlockSpec(packed["dec_w"].shape, lambda t: (0, 0)),
            pl.BlockSpec(packed["dec_b"].shape, lambda t: (0, 0)),
        ],
        out_specs=(
            pl.BlockSpec((None, Bp, Op), lambda t: (t, 0, 0)),   # logits per step
            pl.BlockSpec((L, Bp, Hp), lambda t: (0, 0, 0)),      # final hidden
        ),
        scratch_shapes=[pltpu.VMEM((L, Bp, Hp), jnp.float32)],   # recurrent state
    )
    return pl.pallas_call(
        _char_rnn_seq_kernel,
        out_shape=(jax.ShapeDtypeStruct((T, Bp, Op), jnp.float32),
                   jax.ShapeDtypeStruct((L, Bp, Hp), jnp.float32)),
        grid_spec=grid_spec,
        compiler_params=pltpu.CompilerParams(
            dimension_semantics=("arbitrary",)),   # sequential recurrence over T
    )(tok_p, packed["embedding"], packed["w"], packed["b"], h0_p,
      packed["dec_w"], packed["dec_b"])


# ----------------------------------------------------------------------------
# Parameters (PyTorch-native layout) and lane-padded, fused packing
# ----------------------------------------------------------------------------
def init_raw_params(key, input_size, hidden_size, output_size, n_layers=1):
    """PyTorch-layout synthetic parameters (uniform init, gate order r,z,n)."""
    H = hidden_size
    bound = 1.0 / (H ** 0.5)

    def u(k, shape):
        return jax.random.uniform(k, shape, jnp.float32, -bound, bound)

    keys = jax.random.split(key, 3 + n_layers)
    raw = {
        "embedding": jax.random.normal(keys[0], (input_size, H), jnp.float32),
        "dec_w": u(keys[1], (output_size, H)),       # nn.Linear weight (O, H)
        "dec_b": u(keys[2], (output_size,)),
        "gru_layers": [],
    }
    for l in range(n_layers):
        k = jax.random.split(keys[3 + l], 4)
        raw["gru_layers"].append((
            u(k[0], (3 * H, H)),     # weight_ih_l{l}  (3H, H_in); H_in == H
            u(k[1], (3 * H, H)),     # weight_hh_l{l}
            u(k[2], (3 * H,)),       # bias_ih_l{l}
            u(k[3], (3 * H,)),       # bias_hh_l{l}
        ))
    return raw


def pack_params(raw, hidden_size, output_size):
    """Transpose / zero-pad / fuse params into MXU-friendly layout.

    Per layer the fused GRU weight is (2*Hp, 4*Hp):
      rows [0:Hp]   multiply x, rows [Hp:2*Hp] multiply h;
      column blocks: [r | z | gi_n | gh_n]  (each Hp wide, lane-aligned).
    r/z biases are pre-summed (b_i + b_h); n keeps b_in (block 2) and b_hn
    (block 3) separate because of the r * (W_hn h + b_hn) term.
    """
    H = hidden_size
    Hp = _round_up(H, LANE)
    Op = _round_up(output_size, LANE)
    V = raw["embedding"].shape[0]
    L = len(raw["gru_layers"])

    emb = jnp.zeros((V, Hp), MATMUL_DTYPE).at[:, :H].set(
        raw["embedding"].astype(MATMUL_DTYPE))

    w = jnp.zeros((L, 2 * Hp, 4 * Hp), MATMUL_DTYPE)
    b = jnp.zeros((L, 1, 4 * Hp), jnp.float32)
    for l, (w_ih, w_hh, bias_ih, bias_hh) in enumerate(raw["gru_layers"]):
        # torch gate order: r (0), z (1), n (2)
        for g in (0, 1):                              # r, z: fuse x and h parts
            wi_g = w_ih[g * H:(g + 1) * H, :].T       # (H_in, H), pre-transposed
            wh_g = w_hh[g * H:(g + 1) * H, :].T
            w = w.at[l, :H, g * Hp:g * Hp + H].set(wi_g.astype(MATMUL_DTYPE))
            w = w.at[l, Hp:Hp + H, g * Hp:g * Hp + H].set(wh_g.astype(MATMUL_DTYPE))
            b = b.at[l, 0, g * Hp:g * Hp + H].set(
                bias_ih[g * H:(g + 1) * H] + bias_hh[g * H:(g + 1) * H])
        # n gate: gi_n (x rows -> column block 2), gh_n (h rows -> column block 3)
        wi_n = w_ih[2 * H:3 * H, :].T
        wh_n = w_hh[2 * H:3 * H, :].T
        w = w.at[l, :H, 2 * Hp:2 * Hp + H].set(wi_n.astype(MATMUL_DTYPE))
        w = w.at[l, Hp:Hp + H, 3 * Hp:3 * Hp + H].set(wh_n.astype(MATMUL_DTYPE))
        b = b.at[l, 0, 2 * Hp:2 * Hp + H].set(bias_ih[2 * H:3 * H])
        b = b.at[l, 0, 3 * Hp:3 * Hp + H].set(bias_hh[2 * H:3 * H])

    dec_w = jnp.zeros((Hp, Op), MATMUL_DTYPE).at[:H, :output_size].set(
        raw["dec_w"].T.astype(MATMUL_DTYPE))
    dec_b = jnp.zeros((1, Op), jnp.float32).at[0, :output_size].set(raw["dec_b"])

    return {"embedding": emb, "w": w, "b": b, "dec_w": dec_w, "dec_b": dec_b}


def init_hidden(n_layers, batch_size, hidden_size):
    return jnp.zeros((n_layers, batch_size, hidden_size), jnp.float32)


# ----------------------------------------------------------------------------
# Forward wrappers
# ----------------------------------------------------------------------------
@functools.partial(jax.jit, static_argnames=("output_size",))
def char_rnn_forward_seq(tokens_seq, hidden, packed, *, output_size):
    """tokens_seq: (T, B) int; hidden: (L, B, H) -> (logits (T, B, O), hidden')."""
    T, B = tokens_seq.shape
    L, _, H = hidden.shape
    Hp = packed["w"].shape[2] // 4
    Bp = _round_up(B, SUBLANE)

    # Padding is done ONCE for the whole sequence (not per token).
    tok_p = jnp.zeros((T, Bp, 1), jnp.int32).at[:, :B, 0].set(
        tokens_seq.astype(jnp.int32))
    h0_p = jnp.zeros((L, Bp, Hp), jnp.float32).at[:, :B, :H].set(hidden)

    logits_p, h_out_p = _seq_forward(tok_p, h0_p, packed)
    return logits_p[:, :B, :output_size], h_out_p[:, :B, :H]


@functools.partial(jax.jit, static_argnames=("output_size",))
def char_rnn_forward(tokens, hidden, packed, *, output_size):
    """Single-step forward matching CharRNN.forward: tokens (B,) -> (B, O)."""
    logits, h_out = char_rnn_forward_seq(tokens[None, :], hidden, packed,
                                         output_size=output_size)
    return logits[0], h_out


# Pure-JAX reference (PyTorch GRU semantics) for correctness checking.
def char_rnn_reference(tokens, hidden, raw):
    x = raw["embedding"][tokens]
    H = x.shape[1]
    new_h = []
    for l, (w_ih, w_hh, b_ih, b_hh) in enumerate(raw["gru_layers"]):
        h = hidden[l]
        gi = x @ w_ih.T + b_ih
        gh = h @ w_hh.T + b_hh
        r = jax.nn.sigmoid(gi[:, :H] + gh[:, :H])
        z = jax.nn.sigmoid(gi[:, H:2 * H] + gh[:, H:2 * H])
        n = jnp.tanh(gi[:, 2 * H:] + r * gh[:, 2 * H:])
        h_new = (1.0 - z) * n + z * h
        new_h.append(h_new)
        x = h_new
    logits = x @ raw["dec_w"].T + raw["dec_b"]
    return logits, jnp.stack(new_h, axis=0)


def char_rnn_reference_seq(tokens_seq, hidden, raw):
    logits_all, h = [], hidden
    for t in range(tokens_seq.shape[0]):
        logits, h = char_rnn_reference(tokens_seq[t], h, raw)
        logits_all.append(logits)
    return jnp.stack(logits_all, axis=0), h


# ----------------------------------------------------------------------------
# Main
# ----------------------------------------------------------------------------
if __name__ == "__main__":
    input_size = 16     # vocab size
    hidden_size = 32
    output_size = 16
    n_layers = 2
    batch_size = 2
    seq_len = 8

    key = jax.random.PRNGKey(0)
    pkey, tkey = jax.random.split(key)

    raw = init_raw_params(pkey, input_size, hidden_size, output_size, n_layers)
    packed = pack_params(raw, hidden_size, output_size)
    tokens_seq = jax.random.randint(tkey, (seq_len, batch_size), 0, input_size,
                                    jnp.int32)
    hidden = init_hidden(n_layers, batch_size, hidden_size)

    # ---- full-sequence fused kernel (time loop inside the kernel) ----------
    logits_seq, h_seq = char_rnn_forward_seq(tokens_seq, hidden, packed,
                                             output_size=output_size)
    jax.block_until_ready((logits_seq, h_seq))

    assert logits_seq.shape == (seq_len, batch_size, output_size)
    assert h_seq.shape == (n_layers, batch_size, hidden_size)
    assert bool(jnp.all(jnp.isfinite(logits_seq)))

    ref_logits_seq, ref_h_seq = char_rnn_reference_seq(tokens_seq, hidden, raw)
    # Loose tolerance: matmul operands run in bf16 and drift accumulates
    # slightly over the recurrence.
    assert bool(jnp.allclose(logits_seq, ref_logits_seq, atol=1e-1, rtol=1e-1)), \
        "sequence logits mismatch vs reference"
    assert bool(jnp.allclose(h_seq, ref_h_seq, atol=1e-1, rtol=1e-1)), \
        "sequence hidden mismatch vs reference"

    # ---- single-step forward (exact CharRNN.forward semantics) -------------
    logits1, h1 = char_rnn_forward(tokens_seq[0], hidden, packed,
                                   output_size=output_size)
    jax.block_until_ready((logits1, h1))
    ref_logits1, ref_h1 = char_rnn_reference(tokens_seq[0], hidden, raw)
    assert logits1.shape == (batch_size, output_size)
    assert h1.shape == (n_layers, batch_size, hidden_size)
    assert bool(jnp.allclose(logits1, ref_logits1, atol=5e-2, rtol=5e-2)), \
        "single-step logits mismatch vs reference"
    assert bool(jnp.allclose(h1, ref_h1, atol=5e-2, rtol=5e-2)), \
        "single-step hidden mismatch vs reference"

    print("KERNEL_OK")
</pallas_src>

<mosaic_0001>
module attributes {stable_mosaic.version = 11 : i64} {
  func.func @_char_rnn_seq_kernel(%arg0: i32, %arg1: memref<1x8x1xi32, #tpu.memory_space<vmem>>, %arg2: memref<16x128xbf16, #tpu.memory_space<vmem>>, %arg3: memref<2x256x512xbf16, #tpu.memory_space<vmem>>, %arg4: memref<2x1x512xf32, #tpu.memory_space<vmem>>, %arg5: memref<2x8x128xf32, #tpu.memory_space<vmem>>, %arg6: memref<128x128xbf16, #tpu.memory_space<vmem>>, %arg7: memref<1x128xf32, #tpu.memory_space<vmem>>, %arg8: memref<1x8x128xf32, #tpu.memory_space<vmem>>, %arg9: memref<2x8x128xf32, #tpu.memory_space<vmem>>, %arg10: memref<2x8x128xf32, #tpu.memory_space<vmem>>) attributes {dimension_semantics = [#tpu.dimension_semantics<arbitrary>], iteration_bounds = array<i64: 8>, scalar_prefetch = 0 : i64, scratch_operands = 1 : i64, tpu.core_type = #tpu.core_type<tc>, window_params = [{transform_indices = @transform_0, window_bounds = array<i64: 1, 8, 1>}, {pipeline_mode = #tpu.pipeline_mode<synchronous>, transform_indices = @transform_1, window_bounds = array<i64: 16, 128>}, {pipeline_mode = #tpu.pipeline_mode<synchronous>, transform_indices = @transform_2, window_bounds = array<i64: 2, 256, 512>}, {pipeline_mode = #tpu.pipeline_mode<synchronous>, transform_indices = @transform_3, window_bounds = array<i64: 2, 1, 512>}, {pipeline_mode = #tpu.pipeline_mode<synchronous>, transform_indices = @transform_4, window_bounds = array<i64: 2, 8, 128>}, {pipeline_mode = #tpu.pipeline_mode<synchronous>, transform_indices = @transform_5, window_bounds = array<i64: 128, 128>}, {pipeline_mode = #tpu.pipeline_mode<synchronous>, transform_indices = @transform_6, window_bounds = array<i64: 1, 128>}, {transform_indices = @transform_7, window_bounds = array<i64: 1, 8, 128>}, {pipeline_mode = #tpu.pipeline_mode<synchronous>, transform_indices = @transform_8, window_bounds = array<i64: 2, 8, 128>}]} {
    %c0_i32 = arith.constant 0 : i32
    %0 = arith.cmpi eq, %arg0, %c0_i32 : i32
    %1 = arith.extui %0 : i1 to i32
    %c0_i32_0 = arith.constant 0 : i32
    %2 = arith.cmpi ne, %1, %c0_i32_0 : i32
    scf.if %2 {
      %c0_55 = arith.constant 0 : index
      %c0_56 = arith.constant 0 : index
      %c0_57 = arith.constant 0 : index
      %106 = vector.load %arg5[%c0_55, %c0_56, %c0_57] : memref<2x8x128xf32, #tpu.memory_space<vmem>>, vector<2x8x128xf32>
      %c0_58 = arith.constant 0 : index
      %c0_59 = arith.constant 0 : index
      %c0_60 = arith.constant 0 : index
      %107 = vector.load %arg10[%c0_58, %c0_59, %c0_60] : memref<2x8x128xf32, #tpu.memory_space<vmem>>, vector<2x8x128xf32>
      tpu.vector_store %arg10[%c0_58, %c0_59, %c0_60], %106 {strides = array<i32>} : memref<2x8x128xf32, #tpu.memory_space<vmem>>, vector<2x8x128xf32>,
    } else {
    }
    %3 = tpu.iota {dimensions = array<i32: 1>} : vector<8x16xi32>
    %c0 = arith.constant 0 : index
    %c0_1 = arith.constant 0 : index
    %c0_2 = arith.constant 0 : index
    %4 = vector.load %arg1[%c0, %c0_1, %c0_2] : memref<1x8x1xi32, #tpu.memory_space<vmem>>, vector<1x8x1xi32>
    %5 = vector.shape_cast %4 : vector<1x8x1xi32> to vector<8x1xi32>
    %6 = vector.broadcast %5 : vector<8x1xi32> to vector<8x16xi32>
    %7 = arith.cmpi eq, %3, %6 : vector<8x16xi32>
    %cst = arith.constant 1.000000e+00 : f32
    %cst_3 = arith.constant 0.000000e+00 : f32
    %8 = vector.broadcast %cst : f32 to vector<8x16xf32>
    %9 = vector.broadcast %cst_3 : f32 to vector<8x16xf32>
    %10 = arith.select %7, %8, %9 : vector<8x16xi1>, vector<8x16xf32>
    %11 = arith.truncf %10 : vector<8x16xf32> to vector<8x16xbf16>
    %c0_4 = arith.constant 0 : index
    %c0_5 = arith.constant 0 : index
    %12 = vector.load %arg2[%c0_4, %c0_5] : memref<16x128xbf16, #tpu.memory_space<vmem>>, vector<16x128xbf16>
    %cst_6 = arith.constant dense<0.000000e+00> : vector<8x128xf32>
    %13 = tpu.matmul %11, %12, %cst_6 {dimension_numbers = #tpu.dot_dimension_numbers<[1], [0], [0], [1], [0, 0, 1, 1], [], []>} : vector<8x16xbf16>, vector<16x128xbf16>, vector<8x128xf32> -> vector<8x128xf32>
    %c0_7 = arith.constant 0 : index
    %c0_8 = arith.constant 0 : index
    %c0_9 = arith.constant 0 : index
    %14 = vector.load %arg10[%c0_7, %c0_8, %c0_9] : memref<2x8x128xf32, #tpu.memory_space<vmem>>, vector<1x8x128xf32>
    %15 = vector.shape_cast %14 : vector<1x8x128xf32> to vector<8x128xf32>
    %16 = tpu.concatenate %13, %15 in 1 : vector<8x128xf32>, vector<8x128xf32> -> vector<8x256xf32>
    %17 = arith.truncf %16 : vector<8x256xf32> to vector<8x256xbf16>
    %c0_10 = arith.constant 0 : index
    %c0_11 = arith.constant 0 : index
    %c0_12 = arith.constant 0 : index
    %18 = vector.load %arg3[%c0_10, %c0_11, %c0_12] : memref<2x256x512xbf16, #tpu.memory_space<vmem>>, vector<1x256x512xbf16>
    %19 = vector.shape_cast %18 : vector<1x256x512xbf16> to vector<256x512xbf16>
    %cst_13 = arith.constant dense<0.000000e+00> : vector<8x512xf32>
    %20 = tpu.matmul %17, %19, %cst_13 {dimension_numbers = #tpu.dot_dimension_numbers<[1], [0], [0], [1], [0, 0, 1, 1], [], []>} : vector<8x256xbf16>, vector<256x512xbf16>, vector<8x512xf32> -> vector<8x512xf32>
    %c0_14 = arith.constant 0 : index
    %c0_15 = arith.constant 0 : index
    %c0_16 = arith.constant 0 : index
    %21 = vector.load %arg4[%c0_14, %c0_15, %c0_16] : memref<2x1x512xf32, #tpu.memory_space<vmem>>, vector<1x1x512xf32>
    %22 = vector.shape_cast %21 : vector<1x1x512xf32> to vector<1x512xf32>
    %23 = vector.broadcast %22 : vector<1x512xf32> to vector<8x512xf32>
    %24 = arith.addf %20, %23 : vector<8x512xf32>
    %25 = vector.extract_strided_slice %24 {offsets = [0, 0], sizes = [8, 128], strides = [1, 1]} : vector<8x512xf32> to vector<8x128xf32>
    %cst_17 = arith.constant 5.000000e-01 : f32
    %26 = vector.broadcast %cst_17 : f32 to vector<8x128xf32>
    %27 = arith.mulf %26, %25 : vector<8x128xf32>
    %28 = math.tanh %27 : vector<8x128xf32>
    %cst_18 = arith.constant 1.000000e+00 : f32
    %29 = vector.broadcast %cst_18 : f32 to vector<8x128xf32>
    %30 = arith.addf %28, %29 : vector<8x128xf32>
    %cst_19 = arith.constant 5.000000e-01 : f32
    %31 = vector.broadcast %cst_19 : f32 to vector<8x128xf32>
    %32 = arith.mulf %31, %30 : vector<8x128xf32>
    %33 = vector.extract_strided_slice %24 {offsets = [0, 128], sizes = [8, 128], strides = [1, 1]} : vector<8x512xf32> to vector<8x128xf32>
    %cst_20 = arith.constant 5.000000e-01 : f32
    %34 = vector.broadcast %cst_20 : f32 to vector<8x128xf32>
    %35 = arith.mulf %34, %33 : vector<8x128xf32>
    %36 = math.tanh %35 : vector<8x128xf32>
    %cst_21 = arith.constant 1.000000e+00 : f32
    %37 = vector.broadcast %cst_21 : f32 to vector<8x128xf32>
    %38 = arith.addf %36, %37 : vector<8x128xf32>
    %cst_22 = arith.constant 5.000000e-01 : f32
    %39 = vector.broadcast %cst_22 : f32 to vector<8x128xf32>
    %40 = arith.mulf %39, %38 : vector<8x128xf32>
    %41 = vector.extract_strided_slice %24 {offsets = [0, 256], sizes = [8, 128], strides = [1, 1]} : vector<8x512xf32> to vector<8x128xf32>
    %42 = vector.extract_strided_slice %24 {offsets = [0, 384], sizes = [8, 128], strides = [1, 1]} : vector<8x512xf32> to vector<8x128xf32>
    %43 = arith.mulf %32, %42 : vector<8x128xf32>
    %44 = arith.addf %41, %43 : vector<8x128xf32>
    %45 = math.tanh %44 : vector<8x128xf32>
    %cst_23 = arith.constant 1.000000e+00 : f32
    %46 = vector.broadcast %cst_23 : f32 to vector<8x128xf32>
    %47 = arith.subf %46, %40 : vector<8x128xf32>
    %48 = arith.mulf %47, %45 : vector<8x128xf32>
    %49 = arith.mulf %40, %15 : vector<8x128xf32>
    %50 = arith.addf %48, %49 : vector<8x128xf32>
    %c0_24 = arith.constant 0 : index
    %c0_25 = arith.constant 0 : index
    %c0_26 = arith.constant 0 : index
    %51 = vector.load %arg10[%c0_24, %c0_25, %c0_26] : memref<2x8x128xf32, #tpu.memory_space<vmem>>, vector<1x8x128xf32>
    %52 = vector.shape_cast %51 : vector<1x8x128xf32> to vector<8x128xf32>
    %53 = vector.shape_cast %50 : vector<8x128xf32> to vector<1x8x128xf32>
    tpu.vector_store %arg10[%c0_24, %c0_25, %c0_26], %53 {strides = array<i32>} : memref<2x8x128xf32, #tpu.memory_space<vmem>>, vector<1x8x128xf32>,
    %c1 = arith.constant 1 : index
    %c0_27 = arith.constant 0 : index
    %c0_28 = arith.constant 0 : index
    %54 = vector.load %arg10[%c1, %c0_27, %c0_28] : memref<2x8x128xf32, #tpu.memory_space<vmem>>, vector<1x8x128xf32>
    %55 = vector.shape_cast %54 : vector<1x8x128xf32> to vector<8x128xf32>
    %56 = tpu.concatenate %50, %55 in 1 : vector<8x128xf32>, vector<8x128xf32> -> vector<8x256xf32>
    %57 = arith.truncf %56 : vector<8x256xf32> to vector<8x256xbf16>
    %c1_29 = arith.constant 1 : index
    %c0_30 = arith.constant 0 : index
    %c0_31 = arith.constant 0 : index
    %58 = vector.load %arg3[%c1_29, %c0_30, %c0_31] : memref<2x256x512xbf16, #tpu.memory_space<vmem>>, vector<1x256x512xbf16>
    %59 = vector.shape_cast %58 : vector<1x256x512xbf16> to vector<256x512xbf16>
    %cst_32 = arith.constant dense<0.000000e+00> : vector<8x512xf32>
    %60 = tpu.matmul %57, %59, %cst_32 {dimension_numbers = #tpu.dot_dimension_numbers<[1], [0], [0], [1], [0, 0, 1, 1], [], []>} : vector<8x256xbf16>, vector<256x512xbf16>, vector<8x512xf32> -> vector<8x512xf32>
    %c1_33 = arith.constant 1 : index
    %c0_34 = arith.constant 0 : index
    %c0_35 = arith.constant 0 : index
    %61 = vector.load %arg4[%c1_33, %c0_34, %c0_35] : memref<2x1x512xf32, #tpu.memory_space<vmem>>, vector<1x1x512xf32>
    %62 = vector.shape_cast %61 : vector<1x1x512xf32> to vector<1x512xf32>
    %63 = vector.broadcast %62 : vector<1x512xf32> to vector<8x512xf32>
    %64 = arith.addf %60, %63 : vector<8x512xf32>
    %65 = vector.extract_strided_slice %64 {offsets = [0, 0], sizes = [8, 128], strides = [1, 1]} : vector<8x512xf32> to vector<8x128xf32>
    %cst_36 = arith.constant 5.000000e-01 : f32
    %66 = vector.broadcast %cst_36 : f32 to vector<8x128xf32>
    %67 = arith.mulf %66, %65 : vector<8x128xf32>
    %68 = math.tanh %67 : vector<8x128xf32>
    %cst_37 = arith.constant 1.000000e+00 : f32
    %69 = vector.broadcast %cst_37 : f32 to vector<8x128xf32>
    %70 = arith.addf %68, %69 : vector<8x128xf32>
    %cst_38 = arith.constant 5.000000e-01 : f32
    %71 = vector.broadcast %cst_38 : f32 to vector<8x128xf32>
    %72 = arith.mulf %71, %70 : vector<8x128xf32>
    %73 = vector.extract_strided_slice %64 {offsets = [0, 128], sizes = [8, 128], strides = [1, 1]} : vector<8x512xf32> to vector<8x128xf32>
    %cst_39 = arith.constant 5.000000e-01 : f32
    %74 = vector.broadcast %cst_39 : f32 to vector<8x128xf32>
    %75 = arith.mulf %74, %73 : vector<8x128xf32>
    %76 = math.tanh %75 : vector<8x128xf32>
    %cst_40 = arith.constant 1.000000e+00 : f32
    %77 = vector.broadcast %cst_40 : f32 to vector<8x128xf32>
    %78 = arith.addf %76, %77 : vector<8x128xf32>
    %cst_41 = arith.constant 5.000000e-01 : f32
    %79 = vector.broadcast %cst_41 : f32 to vector<8x128xf32>
    %80 = arith.mulf %79, %78 : vector<8x128xf32>
    %81 = vector.extract_strided_slice %64 {offsets = [0, 256], sizes = [8, 128], strides = [1, 1]} : vector<8x512xf32> to vector<8x128xf32>
    %82 = vector.extract_strided_slice %64 {offsets = [0, 384], sizes = [8, 128], strides = [1, 1]} : vector<8x512xf32> to vector<8x128xf32>
    %83 = arith.mulf %72, %82 : vector<8x128xf32>
    %84 = arith.addf %81, %83 : vector<8x128xf32>
    %85 = math.tanh %84 : vector<8x128xf32>
    %cst_42 = arith.constant 1.000000e+00 : f32
    %86 = vector.broadcast %cst_42 : f32 to vector<8x128xf32>
    %87 = arith.subf %86, %80 : vector<8x128xf32>
    %88 = arith.mulf %87, %85 : vector<8x128xf32>
    %89 = arith.mulf %80, %55 : vector<8x128xf32>
    %90 = arith.addf %88, %89 : vector<8x128xf32>
    %c1_43 = arith.constant 1 : index
    %c0_44 = arith.constant 0 : index
    %c0_45 = arith.constant 0 : index
    %91 = vector.load %arg10[%c1_43, %c0_44, %c0_45] : memref<2x8x128xf32, #tpu.memory_space<vmem>>, vector<1x8x128xf32>
    %92 = vector.shape_cast %91 : vector<1x8x128xf32> to vector<8x128xf32>
    %93 = vector.shape_cast %90 : vector<8x128xf32> to vector<1x8x128xf32>
    tpu.vector_store %arg10[%c1_43, %c0_44, %c0_45], %93 {strides = array<i32>} : memref<2x8x128xf32, #tpu.memory_space<vmem>>, vector<1x8x128xf32>,
    %94 = arith.truncf %90 : vector<8x128xf32> to vector<8x128xbf16>
    %c0_46 = arith.constant 0 : index
    %c0_47 = arith.constant 0 : index
    %95 = vector.load %arg6[%c0_46, %c0_47] : memref<128x128xbf16, #tpu.memory_space<vmem>>, vector<128x128xbf16>
    %cst_48 = arith.constant dense<0.000000e+00> : vector<8x128xf32>
    %96 = tpu.matmul %94, %95, %cst_48 {dimension_numbers = #tpu.dot_dimension_numbers<[1], [0], [0], [1], [0, 0, 1, 1], [], []>} : vector<8x128xbf16>, vector<128x128xbf16>, vector<8x128xf32> -> vector<8x128xf32>
    %c0_49 = arith.constant 0 : index
    %c0_50 = arith.constant 0 : index
    %97 = vector.load %arg7[%c0_49, %c0_50] : memref<1x128xf32, #tpu.memory_space<vmem>>, vector<1x128xf32>
    %98 = vector.broadcast %97 : vector<1x128xf32> to vector<8x128xf32>
    %99 = arith.addf %96, %98 : vector<8x128xf32>
    %c0_51 = arith.constant 0 : index
    %c0_52 = arith.constant 0 : index
    %c0_53 = arith.constant 0 : index
    %100 = vector.load %arg8[%c0_51, %c0_52, %c0_53] : memref<1x8x128xf32, #tpu.memory_space<vmem>>, vector<1x8x128xf32>
    %101 = vector.shape_cast %100 : vector<1x8x128xf32> to vector<8x128xf32>
    %102 = vector.shape_cast %99 : vector<8x128xf32> to vector<1x8x128xf32>
    tpu.vector_store %arg8[%c0_51, %c0_52, %c0_53], %102 {strides = array<i32>} : memref<1x8x128xf32, #tpu.memory_space<vmem>>, vector<1x8x128xf32>,
    %c7_i32 = arith.constant 7 : i32
    %103 = arith.cmpi eq, %arg0, %c7_i32 : i32
    %104 = arith.extui %103 : i1 to i32
    %c0_i32_54 = arith.constant 0 : i32
    %105 = arith.cmpi ne, %104, %c0_i32_54 : i32
    scf.if %105 {
      %c0_55 = arith.constant 0 : index
      %c0_56 = arith.constant 0 : index
      %c0_57 = arith.constant 0 : index
      %106 = vector.load %arg10[%c0_55, %c0_56, %c0_57] : memref<2x8x128xf32, #tpu.memory_space<vmem>>, vector<2x8x128xf32>
      %c0_58 = arith.constant 0 : index
      %c0_59 = arith.constant 0 : index
      %c0_60 = arith.constant 0 : index
      %107 = vector.load %arg9[%c0_58, %c0_59, %c0_60] : memref<2x8x128xf32, #tpu.memory_space<vmem>>, vector<2x8x128xf32>
      tpu.vector_store %arg9[%c0_58, %c0_59, %c0_60], %106 {strides = array<i32>} : memref<2x8x128xf32, #tpu.memory_space<vmem>>, vector<2x8x128xf32>,
    } else {
    }
    return
  }
  func.func @transform_0(%arg0: i32) -> (i32, i32, i32) {
    %c0_i32 = arith.constant 0 : i32
    %c0_i32_0 = arith.constant 0 : i32
    %c0_i32_1 = arith.constant 0 : i32
    return %arg0, %c0_i32, %c0_i32_0 : i32, i32, i32
  }
  func.func @transform_1(%arg0: i32) -> (i32, i32) {
    %c0_i32 = arith.constant 0 : i32
    %c0_i32_0 = arith.constant 0 : i32
    %c0_i32_1 = arith.constant 0 : i32
    return %c0_i32, %c0_i32_0 : i32, i32
  }
  func.func @transform_2(%arg0: i32) -> (i32, i32, i32) {
    %c0_i32 = arith.constant 0 : i32
    %c0_i32_0 = arith.constant 0 : i32
    %c0_i32_1 = arith.constant 0 : i32
    %c0_i32_2 = arith.constant 0 : i32
    return %c0_i32, %c0_i32_0, %c0_i32_1 : i32, i32, i32
  }
  func.func @transform_3(%arg0: i32) -> (i32, i32, i32) {
    %c0_i32 = arith.constant 0 : i32
    %c0_i32_0 = arith.constant 0 : i32
    %c0_i32_1 = arith.constant 0 : i32
    %c0_i32_2 = arith.constant 0 : i32
    return %c0_i32, %c0_i32_0, %c0_i32_1 : i32, i32, i32
  }
  func.func @transform_4(%arg0: i32) -> (i32, i32, i32) {
    %c0_i32 = arith.constant 0 : i32
    %c0_i32_0 = arith.constant 0 : i32
    %c0_i32_1 = arith.constant 0 : i32
    %c0_i32_2 = arith.constant 0 : i32
    return %c0_i32, %c0_i32_0, %c0_i32_1 : i32, i32, i32
  }
  func.func @transform_5(%arg0: i32) -> (i32, i32) {
    %c0_i32 = arith.constant 0 : i32
    %c0_i32_0 = arith.constant 0 : i32
    %c0_i32_1 = arith.constant 0 : i32
    return %c0_i32, %c0_i32_0 : i32, i32
  }
  func.func @transform_6(%arg0: i32) -> (i32, i32) {
    %c0_i32 = arith.constant 0 : i32
    %c0_i32_0 = arith.constant 0 : i32
    %c0_i32_1 = arith.constant 0 : i32
    return %c0_i32, %c0_i32_0 : i32, i32
  }
  func.func @transform_7(%arg0: i32) -> (i32, i32, i32) {
    %c0_i32 = arith.constant 0 : i32
    %c0_i32_0 = arith.constant 0 : i32
    %c0_i32_1 = arith.constant 0 : i32
    return %arg0, %c0_i32, %c0_i32_0 : i32, i32, i32
  }
  func.func @transform_8(%arg0: i32) -> (i32, i32, i32) {
    %c0_i32 = arith.constant 0 : i32
    %c0_i32_0 = arith.constant 0 : i32
    %c0_i32_1 = arith.constant 0 : i32
    %c0_i32_2 = arith.constant 0 : i32
    return %c0_i32, %c0_i32_0, %c0_i32_1 : i32, i32, i32
  }
}

</mosaic_0001>

<llo_original>
// kernel: char_rnn_forward_seq.1
$region0: #{char_rnn_forward_seq.1}
  #allocation0 [shape = 'u32[]', space=smem, size = 0x4, offset = 0x4, fixed_abs, tag = 'smem constant byte address 0x4 - core index']
  #allocation1 [shape = 'u32[72,128]{1,0:T(1,128)}', space=vmem, size = 0x9000, scoped, tag = 'internal scratch']
  #allocation2 [shape = 'f32[2,8,128]{2,1,0:T(8,128)}', space=vmem, size = 0x2000, scoped, tag = 'scratch operand']
  %s0 = inlined_call_operand.vmem [shape: s32[8,8,1], index: 0, kind: input, shape index: {}]
  %s1 = inlined_call_operand.vmem [shape: bf16[16,128], index: 1, kind: input, shape index: {}]
  %s2 = inlined_call_operand.hbm [shape: bf16[2,256,512], index: 2, kind: input, shape index: {}]
  %s3 = inlined_call_operand.vmem [shape: f32[2,1,512], index: 3, kind: input, shape index: {}]
  %s4 = inlined_call_operand.vmem [shape: f32[2,8,128], index: 4, kind: input, shape index: {}]
  %s5 = inlined_call_operand.vmem [shape: bf16[128,128], index: 5, kind: input, shape index: {}]
  %s6 = inlined_call_operand.vmem [shape: f32[1,128], index: 6, kind: input, shape index: {}]
  %s7 = inlined_call_operand.vmem [shape: f32[8,8,128], index: 7, kind: output, shape index: {0}]
  %s8 = inlined_call_operand.vmem [shape: f32[2,8,128], index: 8, kind: output, shape index: {1}]
  %9 = xla_tuple %s7, %s8
  %s10 = sld [smem:[#allocation0]]
  $region81: #{char_rnn_forward_seq.1} parent=0
    _
  %s12 = ssub.s32 1, %s10
  %s13 = scalar_select 0, %s12, %s10
  $region1: #{char_rnn_forward_seq.1} parent=0
    #allocation3 [shape = 'u8[524288]{0}', space=vmem, size = 0x80000, scoped, tag = 'input window, operand 2, single buffered']
    #allocation4 [shape = 's32[2]{0}', space=sflag, size = 0x8, scoped, tag = 'scoped memory for char_rnn_forward_seq.1']
    %14 = vsyncpa [#allocation4], 0
    loop: start=0, step=1, limit=10
    $region2: #{char_rnn_forward_seq.1} parent=1 // loop_pre_header
      _
    $region3: #{char_rnn_forward_seq.1} parent=1 // loop_header
      %s16 = sphi 0, %s20
      %p17 = scmp.ge.s32.totalorder %s16, 10
      %s26 = sphi 0, %s28
      %s29 = sphi 0, %s26
      %s30 = sphi 0, %s29
      %s46 = sphi 0, %s30
      %s50 = sphi 0, %s50
      %s52 = sphi 0, %s50
      %s53 = sphi 0, %s52
      %s67 = sphi 0, %s53
      %s71 = sphi 0, %s71
      %s73 = sphi 0, %s71
      %s74 = sphi 0, %s73
      %s88 = sphi 0, %s74
      %s92 = sphi 0, %s92
      %s94 = sphi 0, %s92
      %s95 = sphi 0, %s94
      %s109 = sphi 0, %s95
      %s113 = sphi 0, %s113
      %s115 = sphi 0, %s113
      %s116 = sphi 0, %s115
      %s130 = sphi 0, %s116
      %s134 = sphi 0, %s134
      %s136 = sphi 0, %s134
      %s137 = sphi 0, %s136
      %s151 = sphi 0, %s137
      %s155 = sphi 0, %s155
      %s157 = sphi 0, %s155
      %s158 = sphi 0, %s157
      %s172 = sphi 0, %s158
      %s178 = sphi 0, %s180
      %s181 = sphi 0, %s178
      %s182 = sphi 0, %s181
      %s198 = sphi 0, %s182
      %s202 = sphi 0, %s202
      %s204 = sphi 0, %s202
      %s205 = sphi 0, %s204
      %s219 = sphi 0, %s205
    $region4: #{char_rnn_forward_seq.1} parent=1 // loop_header_branch
      %19 = sbr.rel (%p17) target = $region8
    $region5: #{char_rnn_forward_seq.1} parent=1 // loop_body
      %s21 = ssub.s32 %s16, 1
      %s22 = ssub.s32 %s16, 2
      %s23 = sadd.s32 %s16, 1
      %s24 = ssub.s32 %s16, %s23
      %p25 = scmp.eq.s32.totalorder %s24, 0
      %s27 = sadd.s32 %s26, 1
      %s28 = scalar_select %p25, %s26, %s27
      %p31 = pneg %p25
      %p32 = scmp.eq.s32.totalorder %s16, 7
      %p33 = por %p31, %p32
      %p34 = scmp.ne.s32.totalorder %s26, %s29
      %p35 = scmp.eq.s32.totalorder %s16, 0
      %p36 = por %p34, %p35
      %p37 = scmp.ne.s32.totalorder %s26, %s29
      %p38 = scmp.eq.s32.totalorder %s21, 7
      %p39 = por %p37, %p38
      %p40 = scmp.ne.s32.totalorder %s29, %s30
      %p41 = scmp.eq.s32.totalorder %s21, 0
      %p42 = por %p40, %p41
      %p43 = scmp.ne.s32.totalorder %s29, %s30
      %p44 = scmp.eq.s32.totalorder %s22, 7
      %p45 = por %p43, %p44
      %p47 = scmp.ne.s32.totalorder %s30, %s46
      %p48 = scmp.eq.s32.totalorder %s22, 0
      %p49 = por %p47, %p48
      %s51 = sadd.s32 %s50, 1
      %p54 = scmp.eq.s32.totalorder %s16, 7
      %p55 = scmp.ne.s32.totalorder %s50, %s52
      %p56 = scmp.eq.s32.totalorder %s16, 0
      %p57 = por %p55, %p56
      %p58 = scmp.ne.s32.totalorder %s50, %s52
      %p59 = scmp.eq.s32.totalorder %s21, 7
      %p60 = por %p58, %p59
      %p61 = scmp.ne.s32.totalorder %s52, %s53
      %p62 = scmp.eq.s32.totalorder %s21, 0
      %p63 = por %p61, %p62
      %p64 = scmp.ne.s32.totalorder %s52, %s53
      %p65 = scmp.eq.s32.totalorder %s22, 7
      %p66 = por %p64, %p65
      %p68 = scmp.ne.s32.totalorder %s53, %s67
      %p69 = scmp.eq.s32.totalorder %s22, 0
      %p70 = por %p68, %p69
      %s72 = sadd.s32 %s71, 1
      %p75 = scmp.eq.s32.totalorder %s16, 7
      %p76 = scmp.ne.s32.totalorder %s71, %s73
      %p77 = scmp.eq.s32.totalorder %s16, 0
      %p78 = por %p76, %p77
      %p79 = scmp.ne.s32.totalorder %s71, %s73
      %p80 = scmp.eq.s32.totalorder %s21, 7
      %p81 = por %p79, %p80
      %p82 = scmp.ne.s32.totalorder %s73, %s74
      %p83 = scmp.eq.s32.totalorder %s21, 0
      %p84 = por %p82, %p83
      %p85 = scmp.ne.s32.totalorder %s73, %s74
      %p86 = scmp.eq.s32.totalorder %s22, 7
      %p87 = por %p85, %p86
      %p89 = scmp.ne.s32.totalorder %s74, %s88
      %p90 = scmp.eq.s32.totalorder %s22, 0
      %p91 = por %p89, %p90
      %s93 = sadd.s32 %s92, 1
      %p96 = scmp.eq.s32.totalorder %s16, 7
      %p97 = scmp.ne.s32.totalorder %s92, %s94
      %p98 = scmp.eq.s32.totalorder %s16, 0
      %p99 = por %p97, %p98
      %p100 = scmp.ne.s32.totalorder %s92, %s94
      %p101 = scmp.eq.s32.totalorder %s21, 7
      %p102 = por %p100, %p101
      %p103 = scmp.ne.s32.totalorder %s94, %s95
      %p104 = scmp.eq.s32.totalorder %s21, 0
      %p105 = por %p103, %p104
      %p106 = scmp.ne.s32.totalorder %s94, %s95
      %p107 = scmp.eq.s32.totalorder %s22, 7
      %p108 = por %p106, %p107
      %p110 = scmp.ne.s32.totalorder %s95, %s109
      %p111 = scmp.eq.s32.totalorder %s22, 0
      %p112 = por %p110, %p111
      %s114 = sadd.s32 %s113, 1
      %p117 = scmp.eq.s32.totalorder %s16, 7
      %p118 = scmp.ne.s32.totalorder %s113, %s115
      %p119 = scmp.eq.s32.totalorder %s16, 0
      %p120 = por %p118, %p119
      %p121 = scmp.ne.s32.totalorder %s113, %s115
      %p122 = scmp.eq.s32.totalorder %s21, 7
      %p123 = por %p121, %p122
      %p124 = scmp.ne.s32.totalorder %s115, %s116
      %p125 = scmp.eq.s32.totalorder %s21, 0
      %p126 = por %p124, %p125
      %p127 = scmp.ne.s32.totalorder %s115, %s116
      %p128 = scmp.eq.s32.totalorder %s22, 7
      %p129 = por %p127, %p128
      %p131 = scmp.ne.s32.totalorder %s116, %s130
      %p132 = scmp.eq.s32.totalorder %s22, 0
      %p133 = por %p131, %p132
      %s135 = sadd.s32 %s134, 1
      %p138 = scmp.eq.s32.totalorder %s16, 7
      %p139 = scmp.ne.s32.totalorder %s134, %s136
      %p140 = scmp.eq.s32.totalorder %s16, 0
      %p141 = por %p139, %p140
      %p142 = scmp.ne.s32.totalorder %s134, %s136
      %p143 = scmp.eq.s32.totalorder %s21, 7
      %p144 = por %p142, %p143
      %p145 = scmp.ne.s32.totalorder %s136, %s137
      %p146 = scmp.eq.s32.totalorder %s21, 0
      %p147 = por %p145, %p146
      %p148 = scmp.ne.s32.totalorder %s136, %s137
      %p149 = scmp.eq.s32.totalorder %s22, 7
      %p150 = por %p148, %p149
      %p152 = scmp.ne.s32.totalorder %s137, %s151
      %p153 = scmp.eq.s32.totalorder %s22, 0
      %p154 = por %p152, %p153
      %s156 = sadd.s32 %s155, 1
      %p159 = scmp.eq.s32.totalorder %s16, 7
      %p160 = scmp.ne.s32.totalorder %s155, %s157
      %p161 = scmp.eq.s32.totalorder %s16, 0
      %p162 = por %p160, %p161
      %p163 = scmp.ne.s32.totalorder %s155, %s157
      %p164 = scmp.eq.s32.totalorder %s21, 7
      %p165 = por %p163, %p164
      %p166 = scmp.ne.s32.totalorder %s157, %s158
      %p167 = scmp.eq.s32.totalorder %s21, 0
      %p168 = por %p166, %p167
      %p169 = scmp.ne.s32.totalorder %s157, %s158
      %p170 = scmp.eq.s32.totalorder %s22, 7
      %p171 = por %p169, %p170
      %p173 = scmp.ne.s32.totalorder %s158, %s172
      %p174 = scmp.eq.s32.totalorder %s22, 0
      %p175 = por %p173, %p174
      %s176 = ssub.s32 %s16, %s23
      %p177 = scmp.eq.s32.totalorder %s176, 0
      %s179 = sadd.s32 %s178, 1
      %s180 = scalar_select %p177, %s178, %s179
      %p183 = pneg %p177
      %p184 = scmp.eq.s32.totalorder %s16, 7
      %p185 = por %p183, %p184
      %p186 = scmp.ne.s32.totalorder %s178, %s181
      %p187 = scmp.eq.s32.totalorder %s16, 0
      %p188 = por %p186, %p187
      %p189 = scmp.ne.s32.totalorder %s178, %s181
      %p190 = scmp.eq.s32.totalorder %s21, 7
      %p191 = por %p189, %p190
      %p192 = scmp.ne.s32.totalorder %s181, %s182
      %p193 = scmp.eq.s32.totalorder %s21, 0
      %p194 = por %p192, %p193
      %p195 = scmp.ne.s32.totalorder %s181, %s182
      %p196 = scmp.eq.s32.totalorder %s22, 7
      %p197 = por %p195, %p196
      %p199 = scmp.ne.s32.totalorder %s182, %s198
      %p200 = scmp.eq.s32.totalorder %s22, 0
      %p201 = por %p199, %p200
      %s203 = sadd.s32 %s202, 1
      %p206 = scmp.eq.s32.totalorder %s16, 7
      %p207 = scmp.ne.s32.totalorder %s202, %s204
      %p208 = scmp.eq.s32.totalorder %s16, 0
      %p209 = por %p207, %p208
      %p210 = scmp.ne.s32.totalorder %s202, %s204
      %p211 = scmp.eq.s32.totalorder %s21, 7
      %p212 = por %p210, %p211
      %p213 = scmp.ne.s32.totalorder %s204, %s205
      %p214 = scmp.eq.s32.totalorder %s21, 0
      %p215 = por %p213, %p214
      %p216 = scmp.ne.s32.totalorder %s204, %s205
      %p217 = scmp.eq.s32.totalorder %s22, 7
      %p218 = por %p216, %p217
      %p220 = scmp.ne.s32.totalorder %s205, %s219
      %p221 = scmp.eq.s32.totalorder %s22, 0
      %p222 = por %p220, %p221
      %p223 = scmp.le.s32.totalorder 1, %s16
      %p224 = scmp.lt.s32.totalorder %s16, 9
      %p225 = pnand %p223, %p224
      %p226 = pneg %p225
      // Predicated region
      $region9: #{char_rnn_forward_seq.1} parent=5 // pred_check
        _
      $region10: #{char_rnn_forward_seq.1} parent=5 // pred_check_branch
        %228 = sbr.rel (%p225) target = $region12
      $region11: #{char_rnn_forward_seq.1} parent=5 // pred_region
        %s229 = ssub.s32 %s16, 1
        // Predicated region
        $region13: #{char_rnn_forward_seq.1} parent=11 // pred_check
          %p230 = pneg %p63
        $region14: #{char_rnn_forward_seq.1} parent=11 // pred_check_branch
          %232 = sbr.rel (%p230) target = $region16
        $region15: #{char_rnn_forward_seq.1} parent=11 // pred_region
          _
        $region16: #{char_rnn_forward_seq.1} parent=11 // pred_fallthru
          _
        // Predicated region
        $region17: #{char_rnn_forward_seq.1} parent=11 // pred_check
          %p233 = pneg %p84
        $region18: #{char_rnn_forward_seq.1} parent=11 // pred_check_branch
          %235 = sbr.rel (%p233) target = $region20
        $region19: #{char_rnn_forward_seq.1} parent=11 // pred_region
          %237 = vsyncadd [#allocation4], 0
          %s238 = sshll.u32 %s2, 4
          %s239 = int_to_ptr.hbm [resolvable:$true] %s238
          %s240 = sshll.u32 [#allocation3], 4
          %s241 = int_to_ptr.vmem [resolvable:$true] %s240
          %246 = dma.hbm_to_vmem [thread:$0]  %s239, 16384, %s241, [#allocation4], 256, 256, 16
        $region20: #{char_rnn_forward_seq.1} parent=11 // pred_fallthru
          _
        // Predicated region
        $region21: #{char_rnn_forward_seq.1} parent=11 // pred_check
          %p247 = pneg %p105
        $region22: #{char_rnn_forward_seq.1} parent=11 // pred_check_branch
          %249 = sbr.rel (%p247) target = $region24
        $region23: #{char_rnn_forward_seq.1} parent=11 // pred_region
          _
        $region24: #{char_rnn_forward_seq.1} parent=11 // pred_fallthru
          _
        // Predicated region
        $region25: #{char_rnn_forward_seq.1} parent=11 // pred_check
          %p250 = pneg %p126
        $region26: #{char_rnn_forward_seq.1} parent=11 // pred_check_branch
          %252 = sbr.rel (%p250) target = $region28
        $region27: #{char_rnn_forward_seq.1} parent=11 // pred_region
          _
        $region28: #{char_rnn_forward_seq.1} parent=11 // pred_fallthru
          _
        // Predicated region
        $region29: #{char_rnn_forward_seq.1} parent=11 // pred_check
          %p253 = pneg %p147
        $region30: #{char_rnn_forward_seq.1} parent=11 // pred_check_branch
          %255 = sbr.rel (%p253) target = $region32
        $region31: #{char_rnn_forward_seq.1} parent=11 // pred_region
          _
        $region32: #{char_rnn_forward_seq.1} parent=11 // pred_fallthru
          _
        // Predicated region
        $region33: #{char_rnn_forward_seq.1} parent=11 // pred_check
          %p256 = pneg %p168
        $region34: #{char_rnn_forward_seq.1} parent=11 // pred_check_branch
          %258 = sbr.rel (%p256) target = $region36
        $region35: #{char_rnn_forward_seq.1} parent=11 // pred_region
          _
        $region36: #{char_rnn_forward_seq.1} parent=11 // pred_fallthru
          _
      $region12: #{char_rnn_forward_seq.1} parent=5 // pred_fallthru
        _
      %p259 = scmp.lt.s32.totalorder %s16, 8
      // Predicated region
      $region37: #{char_rnn_forward_seq.1} parent=5 // pred_check
        %p260 = pneg %p259
      $region38: #{char_rnn_forward_seq.1} parent=5 // pred_check_branch
        %262 = sbr.rel (%p260) target = $region40
      $region39: #{char_rnn_forward_seq.1} parent=5 // pred_region
        // Predicated region
        $region41: #{char_rnn_forward_seq.1} parent=39 // pred_check
          %p263 = pneg %p36
        $region42: #{char_rnn_forward_seq.1} parent=39 // pred_check_branch
          %265 = sbr.rel (%p263) target = $region44
        $region43: #{char_rnn_forward_seq.1} parent=39 // pred_region
          %p266 = scmp.lt.s32.totalorder %s16, 7
          %s267 = scalar_select %p266, %s16, 7
          %s268 = smul.addr %s267, 8
          %s269 = scalar_lea.vmem %s0, %s268
        $region44: #{char_rnn_forward_seq.1} parent=39 // pred_fallthru
          _
      $region40: #{char_rnn_forward_seq.1} parent=5 // pred_fallthru
        _
      %p270 = scmp.le.s32.totalorder 1, %s16
      %p271 = scmp.lt.s32.totalorder %s16, 9
      %p272 = pnand %p270, %p271
      %p273 = pneg %p272
      // Predicated region
      $region45: #{char_rnn_forward_seq.1} parent=5 // pred_check
        _
      $region46: #{char_rnn_forward_seq.1} parent=5 // pred_check_branch
        %275 = sbr.rel (%p272) target = $region48
      $region47: #{char_rnn_forward_seq.1} parent=5 // pred_region
        %s276 = ssub.s32 %s16, 1
        // Predicated region
        $region49: #{char_rnn_forward_seq.1} parent=47 // pred_check
          %p277 = pneg %p84
        $region50: #{char_rnn_forward_seq.1} parent=47 // pred_check_branch
          %279 = sbr.rel (%p277) target = $region52
        $region51: #{char_rnn_forward_seq.1} parent=47 // pred_region
          %281 = dma.done [#allocation4], 16384
        $region52: #{char_rnn_forward_seq.1} parent=47 // pred_fallthru
          _
        %p282 = scmp.lt.s32.totalorder %s21, 7
        %s283 = scalar_select %p282, %s21, 7
        %s284 = smul.addr %s283, 8
        %s285 = scalar_lea.vmem %s0, %s284
        %p286 = pneg %p42
        %p287 = pneg %p39
        %p288 = pneg %p63
        %p289 = pneg %p60
        %p290 = pneg %p84
        %p291 = pneg %p81
        %p292 = pneg %p105
        %p293 = pneg %p102
        %p294 = pneg %p126
        %p295 = pneg %p123
        %p296 = pneg %p147
        %p297 = pneg %p144
        %p298 = pneg %p168
        %p299 = pneg %p165
        %p300 = pneg %p194
        %p301 = pneg %p191
        %p302 = scmp.lt.s32.totalorder %s21, 7
        %s303 = scalar_select %p302, %s21, 7
        %s304 = smul.addr %s303, 8
        %s305 = scalar_lea.vmem %s7, %s304
        %p306 = pneg %p215
        %p307 = pneg %p212
        %p308 = scmp.lt.s32.totalorder %s21, 7
        %s309 = scalar_select %p308, %s21, 7
        %s310 = smul.addr %s309, 8
        %s311 = scalar_lea.vmem %s0, %s310
        %p312 = scmp.lt.s32.totalorder %s21, 7
        %s313 = scalar_select %p312, %s21, 7
        %s314 = smul.addr %s313, 8
        %s315 = scalar_lea.vmem %s7, %s314
        %p317 = scmp.eq.s32.totalorder %s21, 0
        // Predicated region
        $region53: #{char_rnn_forward_seq.1} parent=47 // pred_check
          %p318 = pneg %p317
        $region54: #{char_rnn_forward_seq.1} parent=47 // pred_check_branch
          %320 = sbr.rel (%p318) target = $region56
        $region55: #{char_rnn_forward_seq.1} parent=47 // pred_region
          %v321 = vld [vmem:[%s4] sm:$0xff]
          %v322 = vld [vmem:[%s4 + $0x8] sm:$0xff]
          %323 = vst [vmem:[#allocation2] sm:$0xff] %v321
          %324 = vst [vmem:[#allocation2 + $0x8] sm:$0xff] %v322
        $region56: #{char_rnn_forward_seq.1} parent=47 // pred_fallthru
          _
        %v325 = vlaneseq
        %v326 = vand.u32 %v325, 127
        %v327 = vld [vmem:[%s311] sm:$0xff]
        %328 = vset.pattern.permute.xlu0 0
        %329 = vperm.xlu0 %328, %v327
        %v330 = vpop.permute.xlu0 %329
        %vm331 = vcmp.eq.s32.totalorder %v326, %v330
        %v332 = vsel %vm331, 1.0, 0.0
        %v333 = vpack.c.bf16 %v332, %v332
        %v334 = vld [vmem:[%s1] sm:$0xf]
        %v335 = vld [vmem:[%s1 + $0x4] sm:$0xf]
        %v338 = vunpack.c.l.b16 %v334
        %v339 = vunpack.c.l.b16 %v335
        %v340 = vpack.c.b16 %v339, %v338
        %vm342 = vcmask 130048
        %v344 = vsel %vm342, %v333, 0
        %346 = vmatpush.bf16.msra.mxu0 0
        %347 = vmatpush.bf16.msra.mxu0 0
        %348 = vmatpush.bf16.msra.mxu0 0
        %349 = vmatpush.bf16.msra.mxu0 0
        %350 = vmatpush.bf16.msra.mxu0 0
        %351 = vmatpush.bf16.msra.mxu0 0
        %352 = vmatpush.bf16.msra.mxu0 0
        %353 = vmatpush.bf16.msra.mxu0 %v340
        %354 = vmatmul.bf16.gmra.mxu0 %v344
        %v355 = vpop.f32.mrf.mxu0
        %v356 = vadd.f32 0.0, %v355
        %v357 = vpop.f32.mrf.mxu0
        %358 = vdwg.mxu0
        %v359 = vld [vmem:[#allocation2] sm:$0xff]
        %v360 = vpack.c.bf16 %v356, %v356
        %v361 = vpack.c.bf16 %v359, %v359
        %v362 = vld [vmem:[#allocation3] sm:$0xff]
        %v363 = vld [vmem:[#allocation3 + $0x8] sm:$0xff]
        %v364 = vld [vmem:[#allocation3 + $0x10] sm:$0xff]
        %v365 = vld [vmem:[#allocation3 + $0x18] sm:$0xff]
        %v366 = vld [vmem:[#allocation3 + $0x20] sm:$0xff]
        %v367 = vld [vmem:[#allocation3 + $0x28] sm:$0xff]
        %v368 = vld [vmem:[#allocation3 + $0x30] sm:$0xff]
        %v369 = vld [vmem:[#allocation3 + $0x38] sm:$0xff]
        %v370 = vld [vmem:[#allocation3 + $0x40] sm:$0xff]
        %v371 = vld [vmem:[#allocation3 + $0x48] sm:$0xff]
        %v372 = vld [vmem:[#allocation3 + $0x50] sm:$0xff]
        %v373 = vld [vmem:[#allocation3 + $0x58] sm:$0xff]
        %v374 = vld [vmem:[#allocation3 + $0x60] sm:$0xff]
        %v375 = vld [vmem:[#allocation3 + $0x68] sm:$0xff]
        %v376 = vld [vmem:[#allocation3 + $0x70] sm:$0xff]
        %v377 = vld [vmem:[#allocation3 + $0x78] sm:$0xff]
        %v378 = vld [vmem:[#allocation3 + $0x80] sm:$0xff]
        %v379 = vld [vmem:[#allocation3 + $0x88] sm:$0xff]
        %v380 = vld [vmem:[#allocation3 + $0x90] sm:$0xff]
        %v381 = vld [vmem:[#allocation3 + $0x98] sm:$0xff]
        %v382 = vld [vmem:[#allocation3 + $0xa0] sm:$0xff]
        %v383 = vld [vmem:[#allocation3 + $0xa8] sm:$0xff]
        %v384 = vld [vmem:[#allocation3 + $0xb0] sm:$0xff]
        %v385 = vld [vmem:[#allocation3 + $0xb8] sm:$0xff]
        %v386 = vld [vmem:[#allocation3 + $0xc0] sm:$0xff]
        %v387 = vld [vmem:[#allocation3 + $0xc8] sm:$0xff]
        %v388 = vld [vmem:[#allocation3 + $0xd0] sm:$0xff]
        %v389 = vld [vmem:[#allocation3 + $0xd8] sm:$0xff]
        %v390 = vld [vmem:[#allocation3 + $0xe0] sm:$0xff]
        %v391 = vld [vmem:[#allocation3 + $0xe8] sm:$0xff]
        %v392 = vld [vmem:[#allocation3 + $0xf0] sm:$0xff]
        %v393 = vld [vmem:[#allocation3 + $0xf8] sm:$0xff]
        %v394 = vld [vmem:[#allocation3 + $0x100] sm:$0xff]
        %v395 = vld [vmem:[#allocation3 + $0x108] sm:$0xff]
        %v396 = vld [vmem:[#allocation3 + $0x110] sm:$0xff]
        %v397 = vld [vmem:[#allocation3 + $0x118] sm:$0xff]
        %v398 = vld [vmem:[#allocation3 + $0x120] sm:$0xff]
        %v399 = vld [vmem:[#allocation3 + $0x128] sm:$0xff]
        %v400 = vld [vmem:[#allocation3 + $0x130] sm:$0xff]
        %v401 = vld [vmem:[#allocation3 + $0x138] sm:$0xff]
        %v402 = vld [vmem:[#allocation3 + $0x140] sm:$0xff]
        %v403 = vld [vmem:[#allocation3 + $0x148] sm:$0xff]
        %v404 = vld [vmem:[#allocation3 + $0x150] sm:$0xff]
        %v405 = vld [vmem:[#allocation3 + $0x158] sm:$0xff]
        %v406 = vld [vmem:[#allocation3 + $0x160] sm:$0xff]
        %v407 = vld [vmem:[#allocation3 + $0x168] sm:$0xff]
        %v408 = vld [vmem:[#allocation3 + $0x170] sm:$0xff]
        %v409 = vld [vmem:[#allocation3 + $0x178] sm:$0xff]
        %v410 = vld [vmem:[#allocation3 + $0x180] sm:$0xff]
        %v411 = vld [vmem:[#allocation3 + $0x188] sm:$0xff]
        %v412 = vld [vmem:[#allocation3 + $0x190] sm:$0xff]
        %v413 = vld [vmem:[#allocation3 + $0x198] sm:$0xff]
        %v414 = vld [vmem:[#allocation3 + $0x1a0] sm:$0xff]
        %v415 = vld [vmem:[#allocation3 + $0x1a8] sm:$0xff]
        %v416 = vld [vmem:[#allocation3 + $0x1b0] sm:$0xff]
        %v417 = vld [vmem:[#allocation3 + $0x1b8] sm:$0xff]
        %v418 = vld [vmem:[#allocation3 + $0x1c0] sm:$0xff]
        %v419 = vld [vmem:[#allocation3 + $0x1c8] sm:$0xff]
        %v420 = vld [vmem:[#allocation3 + $0x1d0] sm:$0xff]
        %v421 = vld [vmem:[#allocation3 + $0x1d8] sm:$0xff]
        %v422 = vld [vmem:[#allocation3 + $0x1e0] sm:$0xff]
        %v423 = vld [vmem:[#allocation3 + $0x1e8] sm:$0xff]
        %v424 = vld [vmem:[#allocation3 + $0x1f0] sm:$0xff]
        %v425 = vld [vmem:[#allocation3 + $0x1f8] sm:$0xff]
        %v426 = vld [vmem:[%s3] sm:$0xf]
        %v428 = vperm.slane %v426, 0
        %v429 = vperm.slane %v426, 1
        %v430 = vperm.slane %v426, 2
        %v431 = vperm.slane %v426, 3
        %v500 = vunpack.c.l.b16 %v362
        %v501 = vunpack.c.h.b16 %v362
        %v502 = vunpack.c.l.b16 %v363
        %v503 = vunpack.c.h.b16 %v363
        %v504 = vunpack.c.l.b16 %v364
        %v505 = vunpack.c.h.b16 %v364
        %v506 = vunpack.c.l.b16 %v365
        %v507 = vunpack.c.h.b16 %v365
        %v508 = vunpack.c.l.b16 %v366
        %v509 = vunpack.c.h.b16 %v366
        %v510 = vunpack.c.l.b16 %v367
        %v511 = vunpack.c.h.b16 %v367
        %v512 = vunpack.c.l.b16 %v368
        %v513 = vunpack.c.h.b16 %v368
        %v514 = vunpack.c.l.b16 %v369
        %v515 = vunpack.c.h.b16 %v369
        %v516 = vunpack.c.l.b16 %v370
        %v517 = vunpack.c.h.b16 %v370
        %v518 = vunpack.c.l.b16 %v371
        %v519 = vunpack.c.h.b16 %v371
        %v520 = vunpack.c.l.b16 %v372
        %v521 = vunpack.c.h.b16 %v372
        %v522 = vunpack.c.l.b16 %v373
        %v523 = vunpack.c.h.b16 %v373
        %v524 = vunpack.c.l.b16 %v374
        %v525 = vunpack.c.h.b16 %v374
        %v526 = vunpack.c.l.b16 %v375
        %v527 = vunpack.c.h.b16 %v375
        %v528 = vunpack.c.l.b16 %v376
        %v529 = vunpack.c.h.b16 %v376
        %v530 = vunpack.c.l.b16 %v377
        %v531 = vunpack.c.h.b16 %v377
        %v532 = vunpack.c.l.b16 %v378
        %v533 = vunpack.c.h.b16 %v378
        %v534 = vunpack.c.l.b16 %v379
        %v535 = vunpack.c.h.b16 %v379
        %v536 = vunpack.c.l.b16 %v380
        %v537 = vunpack.c.h.b16 %v380
        %v538 = vunpack.c.l.b16 %v381
        %v539 = vunpack.c.h.b16 %v381
        %v540 = vunpack.c.l.b16 %v382
        %v541 = vunpack.c.h.b16 %v382
        %v542 = vunpack.c.l.b16 %v383
        %v543 = vunpack.c.h.b16 %v383
        %v544 = vunpack.c.l.b16 %v384
        %v545 = vunpack.c.h.b16 %v384
        %v546 = vunpack.c.l.b16 %v385
        %v547 = vunpack.c.h.b16 %v385
        %v548 = vunpack.c.l.b16 %v386
        %v549 = vunpack.c.h.b16 %v386
        %v550 = vunpack.c.l.b16 %v387
        %v551 = vunpack.c.h.b16 %v387
        %v552 = vunpack.c.l.b16 %v388
        %v553 = vunpack.c.h.b16 %v388
        %v554 = vunpack.c.l.b16 %v389
        %v555 = vunpack.c.h.b16 %v389
        %v556 = vunpack.c.l.b16 %v390
        %v557 = vunpack.c.h.b16 %v390
        %v558 = vunpack.c.l.b16 %v391
        %v559 = vunpack.c.h.b16 %v391
        %v560 = vunpack.c.l.b16 %v392
        %v561 = vunpack.c.h.b16 %v392
        %v562 = vunpack.c.l.b16 %v393
        %v563 = vunpack.c.h.b16 %v393
        %v564 = vunpack.c.l.b16 %v394
        %v565 = vunpack.c.h.b16 %v394
        %v566 = vunpack.c.l.b16 %v395
        %v567 = vunpack.c.h.b16 %v395
        %v568 = vunpack.c.l.b16 %v396
        %v569 = vunpack.c.h.b16 %v396
        %v570 = vunpack.c.l.b16 %v397
        %v571 = vunpack.c.h.b16 %v397
        %v572 = vunpack.c.l.b16 %v398
        %v573 = vunpack.c.h.b16 %v398
        %v574 = vunpack.c.l.b16 %v399
        %v575 = vunpack.c.h.b16 %v399
        %v576 = vunpack.c.l.b16 %v400
        %v577 = vunpack.c.h.b16 %v400
        %v578 = vunpack.c.l.b16 %v401
        %v579 = vunpack.c.h.b16 %v401
        %v580 = vunpack.c.l.b16 %v402
        %v581 = vunpack.c.h.b16 %v402
        %v582 = vunpack.c.l.b16 %v403
        %v583 = vunpack.c.h.b16 %v403
        %v584 = vunpack.c.l.b16 %v404
        %v585 = vunpack.c.h.b16 %v404
        %v586 = vunpack.c.l.b16 %v405
        %v587 = vunpack.c.h.b16 %v405
        %v588 = vunpack.c.l.b16 %v406
        %v589 = vunpack.c.h.b16 %v406
        %v590 = vunpack.c.l.b16 %v407
        %v591 = vunpack.c.h.b16 %v407
        %v592 = vunpack.c.l.b16 %v408
        %v593 = vunpack.c.h.b16 %v408
        %v594 = vunpack.c.l.b16 %v409
        %v595 = vunpack.c.h.b16 %v409
        %v596 = vunpack.c.l.b16 %v410
        %v597 = vunpack.c.h.b16 %v410
        %v598 = vunpack.c.l.b16 %v411
        %v599 = vunpack.c.h.b16 %v411
        %v600 = vunpack.c.l.b16 %v412
        %v601 = vunpack.c.h.b16 %v412
        %v602 = vunpack.c.l.b16 %v413
        %v603 = vunpack.c.h.b16 %v413
        %v604 = vunpack.c.l.b16 %v414
        %v605 = vunpack.c.h.b16 %v414
        %v606 = vunpack.c.l.b16 %v415
        %v607 = vunpack.c.h.b16 %v415
        %v608 = vunpack.c.l.b16 %v416
        %v609 = vunpack.c.h.b16 %v416
        %v610 = vunpack.c.l.b16 %v417
        %v611 = vunpack.c.h.b16 %v417
        %v612 = vunpack.c.l.b16 %v418
        %v613 = vunpack.c.h.b16 %v418
        %v614 = vunpack.c.l.b16 %v419
        %v615 = vunpack.c.h.b16 %v419
        %v616 = vunpack.c.l.b16 %v420
        %v617 = vunpack.c.h.b16 %v420
        %v618 = vunpack.c.l.b16 %v421
        %v619 = vunpack.c.h.b16 %v421
        %v620 = vunpack.c.l.b16 %v422
        %v621 = vunpack.c.h.b16 %v422
        %v622 = vunpack.c.l.b16 %v423
        %v623 = vunpack.c.h.b16 %v423
        %v624 = vunpack.c.l.b16 %v424
        %v625 = vunpack.c.h.b16 %v424
        %v626 = vunpack.c.l.b16 %v425
        %v627 = vunpack.c.h.b16 %v425
        %v628 = vpack.c.b16 %v504, %v500
        %v629 = vpack.c.b16 %v505, %v501
        %v630 = vpack.c.b16 %v506, %v502
        %v631 = vpack.c.b16 %v507, %v503
        %v632 = vpack.c.b16 %v512, %v508
        %v633 = vpack.c.b16 %v513, %v509
        %v634 = vpack.c.b16 %v514, %v510
        %v635 = vpack.c.b16 %v515, %v511
        %v636 = vpack.c.b16 %v520, %v516
        %v637 = vpack.c.b16 %v521, %v517
        %v638 = vpack.c.b16 %v522, %v518
        %v639 = vpack.c.b16 %v523, %v519
        %v640 = vpack.c.b16 %v528, %v524
        %v641 = vpack.c.b16 %v529, %v525
        %v642 = vpack.c.b16 %v530, %v526
        %v643 = vpack.c.b16 %v531, %v527
        %v644 = vpack.c.b16 %v536, %v532
        %v645 = vpack.c.b16 %v537, %v533
        %v646 = vpack.c.b16 %v538, %v534
        %v647 = vpack.c.b16 %v539, %v535
        %v648 = vpack.c.b16 %v544, %v540
        %v649 = vpack.c.b16 %v545, %v541
        %v650 = vpack.c.b16 %v546, %v542
        %v651 = vpack.c.b16 %v547, %v543
        %v652 = vpack.c.b16 %v552, %v548
        %v653 = vpack.c.b16 %v553, %v549
        %v654 = vpack.c.b16 %v554, %v550
        %v655 = vpack.c.b16 %v555, %v551
        %v656 = vpack.c.b16 %v560, %v556
        %v657 = vpack.c.b16 %v561, %v557
        %v658 = vpack.c.b16 %v562, %v558
        %v659 = vpack.c.b16 %v563, %v559
        %v660 = vpack.c.b16 %v568, %v564
        %v661 = vpack.c.b16 %v569, %v565
        %v662 = vpack.c.b16 %v570, %v566
        %v663 = vpack.c.b16 %v571, %v567
        %v664 = vpack.c.b16 %v576, %v572
        %v665 = vpack.c.b16 %v577, %v573
        %v666 = vpack.c.b16 %v578, %v574
        %v667 = vpack.c.b16 %v579, %v575
        %v668 = vpack.c.b16 %v584, %v580
        %v669 = vpack.c.b16 %v585, %v581
        %v670 = vpack.c.b16 %v586, %v582
        %v671 = vpack.c.b16 %v587, %v583
        %v672 = vpack.c.b16 %v592, %v588
        %v673 = vpack.c.b16 %v593, %v589
        %v674 = vpack.c.b16 %v594, %v590
        %v675 = vpack.c.b16 %v595, %v591
        %v676 = vpack.c.b16 %v600, %v596
        %v677 = vpack.c.b16 %v601, %v597
        %v678 = vpack.c.b16 %v602, %v598
        %v679 = vpack.c.b16 %v603, %v599
        %v680 = vpack.c.b16 %v608, %v604
        %v681 = vpack.c.b16 %v609, %v605
        %v682 = vpack.c.b16 %v610, %v606
        %v683 = vpack.c.b16 %v611, %v607
        %v684 = vpack.c.b16 %v616, %v612
        %v685 = vpack.c.b16 %v617, %v613
        %v686 = vpack.c.b16 %v618, %v614
        %v687 = vpack.c.b16 %v619, %v615
        %v688 = vpack.c.b16 %v624, %v620
        %v689 = vpack.c.b16 %v625, %v621
        %v690 = vpack.c.b16 %v626, %v622
        %v691 = vpack.c.b16 %v627, %v623
        %756 = vmatpush.bf16.msra.mxu0 %v656
        %757 = vmatpush.bf16.msra.mxu0 %v652
        %758 = vmatpush.bf16.msra.mxu0 %v648
        %759 = vmatpush.bf16.msra.mxu0 %v644
        %760 = vmatpush.bf16.msra.mxu0 %v640
        %761 = vmatpush.bf16.msra.mxu0 %v636
        %762 = vmatpush.bf16.msra.mxu0 %v632
        %763 = vmatpush.bf16.msra.mxu0 %v628
        %764 = vmatmul.bf16.gmra.mxu0 %v360
        %v765 = vpop.f32.mrf.mxu0
        %v766 = vadd.f32 %v428, %v765
        %v767 = vpop.f32.mrf.mxu0
        %768 = vdwg.mxu0
        %769 = vmatpush.bf16.msra.mxu0 %v688
        %770 = vmatpush.bf16.msra.mxu0 %v684
        %771 = vmatpush.bf16.msra.mxu0 %v680
        %772 = vmatpush.bf16.msra.mxu0 %v676
        %773 = vmatpush.bf16.msra.mxu0 %v672
        %774 = vmatpush.bf16.msra.mxu0 %v668
        %775 = vmatpush.bf16.msra.mxu0 %v664
        %776 = vmatpush.bf16.msra.mxu0 %v660
        %777 = vmatmul.bf16.gmra.mxu0 %v361
        %v778 = vpop.f32.mrf.mxu0
        %v779 = vadd.f32 %v766, %v778
        %v780 = vpop.f32.mrf.mxu0
        %781 = vdwg.mxu0
        %782 = vmatpush.bf16.msra.mxu0 %v657
        %783 = vmatpush.bf16.msra.mxu0 %v653
        %784 = vmatpush.bf16.msra.mxu0 %v649
        %785 = vmatpush.bf16.msra.mxu0 %v645
        %786 = vmatpush.bf16.msra.mxu0 %v641
        %787 = vmatpush.bf16.msra.mxu0 %v637
        %788 = vmatpush.bf16.msra.mxu0 %v633
        %789 = vmatpush.bf16.msra.mxu0 %v629
        %790 = vmatmul.bf16.gmra.mxu0 %v360
        %v791 = vpop.f32.mrf.mxu0
        %v792 = vadd.f32 %v429, %v791
        %v793 = vpop.f32.mrf.mxu0
        %794 = vdwg.mxu0
        %795 = vmatpush.bf16.msra.mxu0 %v689
        %796 = vmatpush.bf16.msra.mxu0 %v685
        %797 = vmatpush.bf16.msra.mxu0 %v681
        %798 = vmatpush.bf16.msra.mxu0 %v677
        %799 = vmatpush.bf16.msra.mxu0 %v673
        %800 = vmatpush.bf16.msra.mxu0 %v669
        %801 = vmatpush.bf16.msra.mxu0 %v665
        %802 = vmatpush.bf16.msra.mxu0 %v661
        %803 = vmatmul.bf16.gmra.mxu0 %v361
        %v804 = vpop.f32.mrf.mxu0
        %v805 = vadd.f32 %v792, %v804
        %v806 = vpop.f32.mrf.mxu0
        %807 = vdwg.mxu0
        %808 = vmatpush.bf16.msra.mxu0 %v658
        %809 = vmatpush.bf16.msra.mxu0 %v654
        %810 = vmatpush.bf16.msra.mxu0 %v650
        %811 = vmatpush.bf16.msra.mxu0 %v646
        %812 = vmatpush.bf16.msra.mxu0 %v642
        %813 = vmatpush.bf16.msra.mxu0 %v638
        %814 = vmatpush.bf16.msra.mxu0 %v634
        %815 = vmatpush.bf16.msra.mxu0 %v630
        %816 = vmatmul.bf16.gmra.mxu0 %v360
        %v817 = vpop.f32.mrf.mxu0
        %v818 = vadd.f32 %v430, %v817
        %v819 = vpop.f32.mrf.mxu0
        %820 = vdwg.mxu0
        %821 = vmatpush.bf16.msra.mxu0 %v690
        %822 = vmatpush.bf16.msra.mxu0 %v686
        %823 = vmatpush.bf16.msra.mxu0 %v682
        %824 = vmatpush.bf16.msra.mxu0 %v678
        %825 = vmatpush.bf16.msra.mxu0 %v674
        %826 = vmatpush.bf16.msra.mxu0 %v670
        %827 = vmatpush.bf16.msra.mxu0 %v666
        %828 = vmatpush.bf16.msra.mxu0 %v662
        %829 = vmatmul.bf16.gmra.mxu0 %v361
        %v830 = vpop.f32.mrf.mxu0
        %v831 = vadd.f32 %v818, %v830
        %v832 = vpop.f32.mrf.mxu0
        %833 = vdwg.mxu0
        %834 = vmatpush.bf16.msra.mxu0 %v659
        %835 = vmatpush.bf16.msra.mxu0 %v655
        %836 = vmatpush.bf16.msra.mxu0 %v651
        %837 = vmatpush.bf16.msra.mxu0 %v647
        %838 = vmatpush.bf16.msra.mxu0 %v643
        %839 = vmatpush.bf16.msra.mxu0 %v639
        %840 = vmatpush.bf16.msra.mxu0 %v635
        %841 = vmatpush.bf16.msra.mxu0 %v631
        %842 = vmatmul.bf16.gmra.mxu0 %v360
        %v843 = vpop.f32.mrf.mxu0
        %v844 = vadd.f32 %v431, %v843
        %v845 = vpop.f32.mrf.mxu0
        %846 = vdwg.mxu0
        %847 = vmatpush.bf16.msra.mxu0 %v691
        %848 = vmatpush.bf16.msra.mxu0 %v687
        %849 = vmatpush.bf16.msra.mxu0 %v683
        %850 = vmatpush.bf16.msra.mxu0 %v679
        %851 = vmatpush.bf16.msra.mxu0 %v675
        %852 = vmatpush.bf16.msra.mxu0 %v671
        %853 = vmatpush.bf16.msra.mxu0 %v667
        %854 = vmatpush.bf16.msra.mxu0 %v663
        %855 = vmatmul.bf16.gmra.mxu0 %v361
        %v856 = vpop.f32.mrf.mxu0
        %v857 = vadd.f32 %v844, %v856
        %v858 = vpop.f32.mrf.mxu0
        %859 = vdwg.mxu0
        %v860 = vmul.f32 %v779, 0.5
        %v861 = vtanh.pop %v860
        %v862 = vadd.f32 %v861, 1.0
        %v863 = vmul.f32 %v862, 0.5
        %v864 = vmul.f32 %v805, 0.5
        %v865 = vtanh.pop %v864
        %v866 = vadd.f32 %v865, 1.0
        %v867 = vmul.f32 %v866, 0.5
        %v868 = vmul.f32 %v863, %v857
        %v869 = vadd.f32 %v831, %v868
        %v870 = vtanh.pop %v869
        %v871 = vsub.f32 1.0, %v867
        %v872 = vmul.f32 %v871, %v870
        %v873 = vmul.f32 %v867, %v359
        %v874 = vadd.f32 %v872, %v873
        %875 = vst [vmem:[#allocation2] sm:$0xff] %v874
        %s876 = scalar_lea.vmem [#allocation2], 8
        %v877 = vld [vmem:[%s876] sm:$0xff]
        %v878 = vpack.c.bf16 %v874, %v874
        %v879 = vpack.c.bf16 %v877, %v877
        %s880 = scalar_lea.vmem [#allocation3], 512
        %v881 = vld [vmem:[%s880] sm:$0xff]
        %v882 = vld [vmem:[%s880 + $0x8] sm:$0xff]
        %v883 = vld [vmem:[%s880 + $0x10] sm:$0xff]
        %v884 = vld [vmem:[%s880 + $0x18] sm:$0xff]
        %v885 = vld [vmem:[%s880 + $0x20] sm:$0xff]
        %v886 = vld [vmem:[%s880 + $0x28] sm:$0xff]
        %v887 = vld [vmem:[%s880 + $0x30] sm:$0xff]
        %v888 = vld [vmem:[%s880 + $0x38] sm:$0xff]
        %v889 = vld [vmem:[%s880 + $0x40] sm:$0xff]
        %v890 = vld [vmem:[%s880 + $0x48] sm:$0xff]
        %v891 = vld [vmem:[%s880 + $0x50] sm:$0xff]
        %v892 = vld [vmem:[%s880 + $0x58] sm:$0xff]
        %v893 = vld [vmem:[%s880 + $0x60] sm:$0xff]
        %v894 = vld [vmem:[%s880 + $0x68] sm:$0xff]
        %v895 = vld [vmem:[%s880 + $0x70] sm:$0xff]
        %v896 = vld [vmem:[%s880 + $0x78] sm:$0xff]
        %v897 = vld [vmem:[%s880 + $0x80] sm:$0xff]
        %v898 = vld [vmem:[%s880 + $0x88] sm:$0xff]
        %v899 = vld [vmem:[%s880 + $0x90] sm:$0xff]
        %v900 = vld [vmem:[%s880 + $0x98] sm:$0xff]
        %v901 = vld [vmem:[%s880 + $0xa0] sm:$0xff]
        %v902 = vld [vmem:[%s880 + $0xa8] sm:$0xff]
        %v903 = vld [vmem:[%s880 + $0xb0] sm:$0xff]
        %v904 = vld [vmem:[%s880 + $0xb8] sm:$0xff]
        %v905 = vld [vmem:[%s880 + $0xc0] sm:$0xff]
        %v906 = vld [vmem:[%s880 + $0xc8] sm:$0xff]
        %v907 = vld [vmem:[%s880 + $0xd0] sm:$0xff]
        %v908 = vld [vmem:[%s880 + $0xd8] sm:$0xff]
        %v909 = vld [vmem:[%s880 + $0xe0] sm:$0xff]
        %v910 = vld [vmem:[%s880 + $0xe8] sm:$0xff]
        %v911 = vld [vmem:[%s880 + $0xf0] sm:$0xff]
        %v912 = vld [vmem:[%s880 + $0xf8] sm:$0xff]
        %v913 = vld [vmem:[%s880 + $0x100] sm:$0xff]
        %v914 = vld [vmem:[%s880 + $0x108] sm:$0xff]
        %v915 = vld [vmem:[%s880 + $0x110] sm:$0xff]
        %v916 = vld [vmem:[%s880 + $0x118] sm:$0xff]
        %v917 = vld [vmem:[%s880 + $0x120] sm:$0xff]
        %v918 = vld [vmem:[%s880 + $0x128] sm:$0xff]
        %v919 = vld [vmem:[%s880 + $0x130] sm:$0xff]
        %v920 = vld [vmem:[%s880 + $0x138] sm:$0xff]
        %v921 = vld [vmem:[%s880 + $0x140] sm:$0xff]
        %v922 = vld [vmem:[%s880 + $0x148] sm:$0xff]
        %v923 = vld [vmem:[%s880 + $0x150] sm:$0xff]
        %v924 = vld [vmem:[%s880 + $0x158] sm:$0xff]
        %v925 = vld [vmem:[%s880 + $0x160] sm:$0xff]
        %v926 = vld [vmem:[%s880 + $0x168] sm:$0xff]
        %v927 = vld [vmem:[%s880 + $0x170] sm:$0xff]
        %v928 = vld [vmem:[%s880 + $0x178] sm:$0xff]
        %v929 = vld [vmem:[%s880 + $0x180] sm:$0xff]
        %v930 = vld [vmem:[%s880 + $0x188] sm:$0xff]
        %v931 = vld [vmem:[%s880 + $0x190] sm:$0xff]
        %v932 = vld [vmem:[%s880 + $0x198] sm:$0xff]
        %v933 = vld [vmem:[%s880 + $0x1a0] sm:$0xff]
        %v934 = vld [vmem:[%s880 + $0x1a8] sm:$0xff]
        %v935 = vld [vmem:[%s880 + $0x1b0] sm:$0xff]
        %v936 = vld [vmem:[%s880 + $0x1b8] sm:$0xff]
        %v937 = vld [vmem:[%s880 + $0x1c0] sm:$0xff]
        %v938 = vld [vmem:[%s880 + $0x1c8] sm:$0xff]
        %v939 = vld [vmem:[%s880 + $0x1d0] sm:$0xff]
        %v940 = vld [vmem:[%s880 + $0x1d8] sm:$0xff]
        %v941 = vld [vmem:[%s880 + $0x1e0] sm:$0xff]
        %v942 = vld [vmem:[%s880 + $0x1e8] sm:$0xff]
        %v943 = vld [vmem:[%s880 + $0x1f0] sm:$0xff]
        %v944 = vld [vmem:[%s880 + $0x1f8] sm:$0xff]
        %s945 = scalar_lea.vmem %s3, 4
        %v946 = vld [vmem:[%s945] sm:$0xf]
        %v948 = vperm.slane %v946, 0
        %v949 = vperm.slane %v946, 1
        %v950 = vperm.slane %v946, 2
        %v951 = vperm.slane %v946, 3
        %v1020 = vunpack.c.l.b16 %v881
        %v1021 = vunpack.c.h.b16 %v881
        %v1022 = vunpack.c.l.b16 %v882
        %v1023 = vunpack.c.h.b16 %v882
        %v1024 = vunpack.c.l.b16 %v883
        %v1025 = vunpack.c.h.b16 %v883
        %v1026 = vunpack.c.l.b16 %v884
        %v1027 = vunpack.c.h.b16 %v884
        %v1028 = vunpack.c.l.b16 %v885
        %v1029 = vunpack.c.h.b16 %v885
        %v1030 = vunpack.c.l.b16 %v886
        %v1031 = vunpack.c.h.b16 %v886
        %v1032 = vunpack.c.l.b16 %v887
        %v1033 = vunpack.c.h.b16 %v887
        %v1034 = vunpack.c.l.b16 %v888
        %v1035 = vunpack.c.h.b16 %v888
        %v1036 = vunpack.c.l.b16 %v889
        %v1037 = vunpack.c.h.b16 %v889
        %v1038 = vunpack.c.l.b16 %v890
        %v1039 = vunpack.c.h.b16 %v890
        %v1040 = vunpack.c.l.b16 %v891
        %v1041 = vunpack.c.h.b16 %v891
        %v1042 = vunpack.c.l.b16 %v892
        %v1043 = vunpack.c.h.b16 %v892
        %v1044 = vunpack.c.l.b16 %v893
        %v1045 = vunpack.c.h.b16 %v893
        %v1046 = vunpack.c.l.b16 %v894
        %v1047 = vunpack.c.h.b16 %v894
        %v1048 = vunpack.c.l.b16 %v895
        %v1049 = vunpack.c.h.b16 %v895
        %v1050 = vunpack.c.l.b16 %v896
        %v1051 = vunpack.c.h.b16 %v896
        %v1052 = vunpack.c.l.b16 %v897
        %v1053 = vunpack.c.h.b16 %v897
        %v1054 = vunpack.c.l.b16 %v898
        %v1055 = vunpack.c.h.b16 %v898
        %v1056 = vunpack.c.l.b16 %v899
        %v1057 = vunpack.c.h.b16 %v899
        %v1058 = vunpack.c.l.b16 %v900
        %v1059 = vunpack.c.h.b16 %v900
        %v1060 = vunpack.c.l.b16 %v901
        %v1061 = vunpack.c.h.b16 %v901
        %v1062 = vunpack.c.l.b16 %v902
        %v1063 = vunpack.c.h.b16 %v902
        %v1064 = vunpack.c.l.b16 %v903
        %v1065 = vunpack.c.h.b16 %v903
        %v1066 = vunpack.c.l.b16 %v904
        %v1067 = vunpack.c.h.b16 %v904
        %v1068 = vunpack.c.l.b16 %v905
        %v1069 = vunpack.c.h.b16 %v905
        %v1070 = vunpack.c.l.b16 %v906
        %v1071 = vunpack.c.h.b16 %v906
        %v1072 = vunpack.c.l.b16 %v907
        %v1073 = vunpack.c.h.b16 %v907
        %v1074 = vunpack.c.l.b16 %v908
        %v1075 = vunpack.c.h.b16 %v908
        %v1076 = vunpack.c.l.b16 %v909
        %v1077 = vunpack.c.h.b16 %v909
        %v1078 = vunpack.c.l.b16 %v910
        %v1079 = vunpack.c.h.b16 %v910
        %v1080 = vunpack.c.l.b16 %v911
        %v1081 = vunpack.c.h.b16 %v911
        %v1082 = vunpack.c.l.b16 %v912
        %v1083 = vunpack.c.h.b16 %v912
        %v1084 = vunpack.c.l.b16 %v913
        %v1085 = vunpack.c.h.b16 %v913
        %v1086 = vunpack.c.l.b16 %v914
        %v1087 = vunpack.c.h.b16 %v914
        %v1088 = vunpack.c.l.b16 %v915
        %v1089 = vunpack.c.h.b16 %v915
        %v1090 = vunpack.c.l.b16 %v916
        %v1091 = vunpack.c.h.b16 %v916
        %v1092 = vunpack.c.l.b16 %v917
        %v1093 = vunpack.c.h.b16 %v917
        %v1094 = vunpack.c.l.b16 %v918
        %v1095 = vunpack.c.h.b16 %v918
        %v1096 = vunpack.c.l.b16 %v919
        %v1097 = vunpack.c.h.b16 %v919
        %v1098 = vunpack.c.l.b16 %v920
        %v1099 = vunpack.c.h.b16 %v920
        %v1100 = vunpack.c.l.b16 %v921
        %v1101 = vunpack.c.h.b16 %v921
        %v1102 = vunpack.c.l.b16 %v922
        %v1103 = vunpack.c.h.b16 %v922
        %v1104 = vunpack.c.l.b16 %v923
        %v1105 = vunpack.c.h.b16 %v923
        %v1106 = vunpack.c.l.b16 %v924
        %v1107 = vunpack.c.h.b16 %v924
        %v1108 = vunpack.c.l.b16 %v925
        %v1109 = vunpack.c.h.b16 %v925
        %v1110 = vunpack.c.l.b16 %v926
        %v1111 = vunpack.c.h.b16 %v926
        %v1112 = vunpack.c.l.b16 %v927
        %v1113 = vunpack.c.h.b16 %v927
        %v1114 = vunpack.c.l.b16 %v928
        %v1115 = vunpack.c.h.b16 %v928
        %v1116 = vunpack.c.l.b16 %v929
        %v1117 = vunpack.c.h.b16 %v929
        %v1118 = vunpack.c.l.b16 %v930
        %v1119 = vunpack.c.h.b16 %v930
        %v1120 = vunpack.c.l.b16 %v931
        %v1121 = vunpack.c.h.b16 %v931
        %v1122 = vunpack.c.l.b16 %v932
        %v1123 = vunpack.c.h.b16 %v932
        %v1124 = vunpack.c.l.b16 %v933
        %v1125 = vunpack.c.h.b16 %v933
        %v1126 = vunpack.c.l.b16 %v934
        %v1127 = vunpack.c.h.b16 %v934
        %v1128 = vunpack.c.l.b16 %v935
        %v1129 = vunpack.c.h.b16 %v935
        %v1130 = vunpack.c.l.b16 %v936
        %v1131 = vunpack.c.h.b16 %v936
        %v1132 = vunpack.c.l.b16 %v937
        %v1133 = vunpack.c.h.b16 %v937
        %v1134 = vunpack.c.l.b16 %v938
        %v1135 = vunpack.c.h.b16 %v938
        %v1136 = vunpack.c.l.b16 %v939
        %v1137 = vunpack.c.h.b16 %v939
        %v1138 = vunpack.c.l.b16 %v940
        %v1139 = vunpack.c.h.b16 %v940
        %v1140 = vunpack.c.l.b16 %v941
        %v1141 = vunpack.c.h.b16 %v941
        %v1142 = vunpack.c.l.b16 %v942
        %v1143 = vunpack.c.h.b16 %v942
        %v1144 = vunpack.c.l.b16 %v943
        %v1145 = vunpack.c.h.b16 %v943
        %v1146 = vunpack.c.l.b16 %v944
        %v1147 = vunpack.c.h.b16 %v944
        %v1148 = vpack.c.b16 %v1024, %v1020
        %v1149 = vpack.c.b16 %v1025, %v1021
        %v1150 = vpack.c.b16 %v1026, %v1022
        %v1151 = vpack.c.b16 %v1027, %v1023
        %v1152 = vpack.c.b16 %v1032, %v1028
        %v1153 = vpack.c.b16 %v1033, %v1029
        %v1154 = vpack.c.b16 %v1034, %v1030
        %v1155 = vpack.c.b16 %v1035, %v1031
        %v1156 = vpack.c.b16 %v1040, %v1036
        %v1157 = vpack.c.b16 %v1041, %v1037
        %v1158 = vpack.c.b16 %v1042, %v1038
        %v1159 = vpack.c.b16 %v1043, %v1039
        %v1160 = vpack.c.b16 %v1048, %v1044
        %v1161 = vpack.c.b16 %v1049, %v1045
        %v1162 = vpack.c.b16 %v1050, %v1046
        %v1163 = vpack.c.b16 %v1051, %v1047
        %v1164 = vpack.c.b16 %v1056, %v1052
        %v1165 = vpack.c.b16 %v1057, %v1053
        %v1166 = vpack.c.b16 %v1058, %v1054
        %v1167 = vpack.c.b16 %v1059, %v1055
        %v1168 = vpack.c.b16 %v1064, %v1060
        %v1169 = vpack.c.b16 %v1065, %v1061
        %v1170 = vpack.c.b16 %v1066, %v1062
        %v1171 = vpack.c.b16 %v1067, %v1063
        %v1172 = vpack.c.b16 %v1072, %v1068
        %v1173 = vpack.c.b16 %v1073, %v1069
        %v1174 = vpack.c.b16 %v1074, %v1070
        %v1175 = vpack.c.b16 %v1075, %v1071
        %v1176 = vpack.c.b16 %v1080, %v1076
        %v1177 = vpack.c.b16 %v1081, %v1077
        %v1178 = vpack.c.b16 %v1082, %v1078
        %v1179 = vpack.c.b16 %v1083, %v1079
        %v1180 = vpack.c.b16 %v1088, %v1084
        %v1181 = vpack.c.b16 %v1089, %v1085
        %v1182 = vpack.c.b16 %v1090, %v1086
        %v1183 = vpack.c.b16 %v1091, %v1087
        %v1184 = vpack.c.b16 %v1096, %v1092
        %v1185 = vpack.c.b16 %v1097, %v1093
        %v1186 = vpack.c.b16 %v1098, %v1094
        %v1187 = vpack.c.b16 %v1099, %v1095
        %v1188 = vpack.c.b16 %v1104, %v1100
        %v1189 = vpack.c.b16 %v1105, %v1101
        %v1190 = vpack.c.b16 %v1106, %v1102
        %v1191 = vpack.c.b16 %v1107, %v1103
        %v1192 = vpack.c.b16 %v1112, %v1108
        %v1193 = vpack.c.b16 %v1113, %v1109
        %v1194 = vpack.c.b16 %v1114, %v1110
        %v1195 = vpack.c.b16 %v1115, %v1111
        %v1196 = vpack.c.b16 %v1120, %v1116
        %v1197 = vpack.c.b16 %v1121, %v1117
        %v1198 = vpack.c.b16 %v1122, %v1118
        %v1199 = vpack.c.b16 %v1123, %v1119
        %v1200 = vpack.c.b16 %v1128, %v1124
        %v1201 = vpack.c.b16 %v1129, %v1125
        %v1202 = vpack.c.b16 %v1130, %v1126
        %v1203 = vpack.c.b16 %v1131, %v1127
        %v1204 = vpack.c.b16 %v1136, %v1132
        %v1205 = vpack.c.b16 %v1137, %v1133
        %v1206 = vpack.c.b16 %v1138, %v1134
        %v1207 = vpack.c.b16 %v1139, %v1135
        %v1208 = vpack.c.b16 %v1144, %v1140
        %v1209 = vpack.c.b16 %v1145, %v1141
        %v1210 = vpack.c.b16 %v1146, %v1142
        %v1211 = vpack.c.b16 %v1147, %v1143
        %1276 = vmatpush.bf16.msra.mxu0 %v1176
        %1277 = vmatpush.bf16.msra.mxu0 %v1172
        %1278 = vmatpush.bf16.msra.mxu0 %v1168
        %1279 = vmatpush.bf16.msra.mxu0 %v1164
        %1280 = vmatpush.bf16.msra.mxu0 %v1160
        %1281 = vmatpush.bf16.msra.mxu0 %v1156
        %1282 = vmatpush.bf16.msra.mxu0 %v1152
        %1283 = vmatpush.bf16.msra.mxu0 %v1148
        %1284 = vmatmul.bf16.gmra.mxu0 %v878
        %v1285 = vpop.f32.mrf.mxu0
        %v1286 = vadd.f32 %v948, %v1285
        %v1287 = vpop.f32.mrf.mxu0
        %1288 = vdwg.mxu0
        %1289 = vmatpush.bf16.msra.mxu0 %v1208
        %1290 = vmatpush.bf16.msra.mxu0 %v1204
        %1291 = vmatpush.bf16.msra.mxu0 %v1200
        %1292 = vmatpush.bf16.msra.mxu0 %v1196
        %1293 = vmatpush.bf16.msra.mxu0 %v1192
        %1294 = vmatpush.bf16.msra.mxu0 %v1188
        %1295 = vmatpush.bf16.msra.mxu0 %v1184
        %1296 = vmatpush.bf16.msra.mxu0 %v1180
        %1297 = vmatmul.bf16.gmra.mxu0 %v879
        %v1298 = vpop.f32.mrf.mxu0
        %v1299 = vadd.f32 %v1286, %v1298
        %v1300 = vpop.f32.mrf.mxu0
        %1301 = vdwg.mxu0
        %1302 = vmatpush.bf16.msra.mxu0 %v1177
        %1303 = vmatpush.bf16.msra.mxu0 %v1173
        %1304 = vmatpush.bf16.msra.mxu0 %v1169
        %1305 = vmatpush.bf16.msra.mxu0 %v1165
        %1306 = vmatpush.bf16.msra.mxu0 %v1161
        %1307 = vmatpush.bf16.msra.mxu0 %v1157
        %1308 = vmatpush.bf16.msra.mxu0 %v1153
        %1309 = vmatpush.bf16.msra.mxu0 %v1149
        %1310 = vmatmul.bf16.gmra.mxu0 %v878
        %v1311 = vpop.f32.mrf.mxu0
        %v1312 = vadd.f32 %v949, %v1311
        %v1313 = vpop.f32.mrf.mxu0
        %1314 = vdwg.mxu0
        %1315 = vmatpush.bf16.msra.mxu0 %v1209
        %1316 = vmatpush.bf16.msra.mxu0 %v1205
        %1317 = vmatpush.bf16.msra.mxu0 %v1201
        %1318 = vmatpush.bf16.msra.mxu0 %v1197
        %1319 = vmatpush.bf16.msra.mxu0 %v1193
        %1320 = vmatpush.bf16.msra.mxu0 %v1189
        %1321 = vmatpush.bf16.msra.mxu0 %v1185
        %1322 = vmatpush.bf16.msra.mxu0 %v1181
        %1323 = vmatmul.bf16.gmra.mxu0 %v879
        %v1324 = vpop.f32.mrf.mxu0
        %v1325 = vadd.f32 %v1312, %v1324
        %v1326 = vpop.f32.mrf.mxu0
        %1327 = vdwg.mxu0
        %1328 = vmatpush.bf16.msra.mxu0 %v1178
        %1329 = vmatpush.bf16.msra.mxu0 %v1174
        %1330 = vmatpush.bf16.msra.mxu0 %v1170
        %1331 = vmatpush.bf16.msra.mxu0 %v1166
        %1332 = vmatpush.bf16.msra.mxu0 %v1162
        %1333 = vmatpush.bf16.msra.mxu0 %v1158
        %1334 = vmatpush.bf16.msra.mxu0 %v1154
        %1335 = vmatpush.bf16.msra.mxu0 %v1150
        %1336 = vmatmul.bf16.gmra.mxu0 %v878
        %v1337 = vpop.f32.mrf.mxu0
        %v1338 = vadd.f32 %v950, %v1337
        %v1339 = vpop.f32.mrf.mxu0
        %1340 = vdwg.mxu0
        %1341 = vmatpush.bf16.msra.mxu0 %v1210
        %1342 = vmatpush.bf16.msra.mxu0 %v1206
        %1343 = vmatpush.bf16.msra.mxu0 %v1202
        %1344 = vmatpush.bf16.msra.mxu0 %v1198
        %1345 = vmatpush.bf16.msra.mxu0 %v1194
        %1346 = vmatpush.bf16.msra.mxu0 %v1190
        %1347 = vmatpush.bf16.msra.mxu0 %v1186
        %1348 = vmatpush.bf16.msra.mxu0 %v1182
        %1349 = vmatmul.bf16.gmra.mxu0 %v879
        %v1350 = vpop.f32.mrf.mxu0
        %v1351 = vadd.f32 %v1338, %v1350
        %v1352 = vpop.f32.mrf.mxu0
        %1353 = vdwg.mxu0
        %1354 = vmatpush.bf16.msra.mxu0 %v1179
        %1355 = vmatpush.bf16.msra.mxu0 %v1175
        %1356 = vmatpush.bf16.msra.mxu0 %v1171
        %1357 = vmatpush.bf16.msra.mxu0 %v1167
        %1358 = vmatpush.bf16.msra.mxu0 %v1163
        %1359 = vmatpush.bf16.msra.mxu0 %v1159
        %1360 = vmatpush.bf16.msra.mxu0 %v1155
        %1361 = vmatpush.bf16.msra.mxu0 %v1151
        %1362 = vmatmul.bf16.gmra.mxu0 %v878
        %v1363 = vpop.f32.mrf.mxu0
        %v1364 = vadd.f32 %v951, %v1363
        %v1365 = vpop.f32.mrf.mxu0
        %1366 = vdwg.mxu0
        %1367 = vmatpush.bf16.msra.mxu0 %v1211
        %1368 = vmatpush.bf16.msra.mxu0 %v1207
        %1369 = vmatpush.bf16.msra.mxu0 %v1203
        %1370 = vmatpush.bf16.msra.mxu0 %v1199
        %1371 = vmatpush.bf16.msra.mxu0 %v1195
        %1372 = vmatpush.bf16.msra.mxu0 %v1191
        %1373 = vmatpush.bf16.msra.mxu0 %v1187
        %1374 = vmatpush.bf16.msra.mxu0 %v1183
        %1375 = vmatmul.bf16.gmra.mxu0 %v879
        %v1376 = vpop.f32.mrf.mxu0
        %v1377 = vadd.f32 %v1364, %v1376
        %v1378 = vpop.f32.mrf.mxu0
        %1379 = vdwg.mxu0
        %v1380 = vmul.f32 %v1299, 0.5
        %v1381 = vtanh.pop %v1380
        %v1382 = vadd.f32 %v1381, 1.0
        %v1383 = vmul.f32 %v1382, 0.5
        %v1384 = vmul.f32 %v1325, 0.5
        %v1385 = vtanh.pop %v1384
        %v1386 = vadd.f32 %v1385, 1.0
        %v1387 = vmul.f32 %v1386, 0.5
        %v1388 = vmul.f32 %v1383, %v1377
        %v1389 = vadd.f32 %v1351, %v1388
        %v1390 = vtanh.pop %v1389
        %v1391 = vsub.f32 1.0, %v1387
        %v1392 = vmul.f32 %v1391, %v1390
        %v1393 = vmul.f32 %v1387, %v877
        %v1394 = vadd.f32 %v1392, %v1393
        %1395 = vst [vmem:[%s876] sm:$0xff] %v1394
        %v1396 = vpack.c.bf16 %v1394, %v1394
        %v1397 = vld [vmem:[%s5] sm:$0xf]
        %v1398 = vld [vmem:[%s5 + $0x4] sm:$0xf]
        %v1399 = vld [vmem:[%s5 + $0x8] sm:$0xf]
        %v1400 = vld [vmem:[%s5 + $0xc] sm:$0xf]
        %v1401 = vld [vmem:[%s5 + $0x10] sm:$0xf]
        %v1402 = vld [vmem:[%s5 + $0x14] sm:$0xf]
        %v1403 = vld [vmem:[%s5 + $0x18] sm:$0xf]
        %v1404 = vld [vmem:[%s5 + $0x1c] sm:$0xf]
        %v1405 = vld [vmem:[%s5 + $0x20] sm:$0xf]
        %v1406 = vld [vmem:[%s5 + $0x24] sm:$0xf]
        %v1407 = vld [vmem:[%s5 + $0x28] sm:$0xf]
        %v1408 = vld [vmem:[%s5 + $0x2c] sm:$0xf]
        %v1409 = vld [vmem:[%s5 + $0x30] sm:$0xf]
        %v1410 = vld [vmem:[%s5 + $0x34] sm:$0xf]
        %v1411 = vld [vmem:[%s5 + $0x38] sm:$0xf]
        %v1412 = vld [vmem:[%s5 + $0x3c] sm:$0xf]
        %v1413 = vld [vmem:[%s6] sm:$0x1]
        %v1415 = vperm.slane %v1413, 0
        %v1433 = vunpack.c.l.b16 %v1397
        %v1434 = vunpack.c.l.b16 %v1398
        %v1435 = vunpack.c.l.b16 %v1399
        %v1436 = vunpack.c.l.b16 %v1400
        %v1437 = vunpack.c.l.b16 %v1401
        %v1438 = vunpack.c.l.b16 %v1402
        %v1439 = vunpack.c.l.b16 %v1403
        %v1440 = vunpack.c.l.b16 %v1404
        %v1441 = vunpack.c.l.b16 %v1405
        %v1442 = vunpack.c.l.b16 %v1406
        %v1443 = vunpack.c.l.b16 %v1407
        %v1444 = vunpack.c.l.b16 %v1408
        %v1445 = vunpack.c.l.b16 %v1409
        %v1446 = vunpack.c.l.b16 %v1410
        %v1447 = vunpack.c.l.b16 %v1411
        %v1448 = vunpack.c.l.b16 %v1412
        %v1449 = vpack.c.b16 %v1434, %v1433
        %v1450 = vpack.c.b16 %v1436, %v1435
        %v1451 = vpack.c.b16 %v1438, %v1437
        %v1452 = vpack.c.b16 %v1440, %v1439
        %v1453 = vpack.c.b16 %v1442, %v1441
        %v1454 = vpack.c.b16 %v1444, %v1443
        %v1455 = vpack.c.b16 %v1446, %v1445
        %v1456 = vpack.c.b16 %v1448, %v1447
        %1465 = vmatpush.bf16.msra.mxu0 %v1456
        %1466 = vmatpush.bf16.msra.mxu0 %v1455
        %1467 = vmatpush.bf16.msra.mxu0 %v1454
        %1468 = vmatpush.bf16.msra.mxu0 %v1453
        %1469 = vmatpush.bf16.msra.mxu0 %v1452
        %1470 = vmatpush.bf16.msra.mxu0 %v1451
        %1471 = vmatpush.bf16.msra.mxu0 %v1450
        %1472 = vmatpush.bf16.msra.mxu0 %v1449
        %1473 = vmatmul.bf16.gmra.mxu0 %v1396
        %v1474 = vpop.f32.mrf.mxu0
        %v1475 = vadd.f32 %v1415, %v1474
        %v1476 = vpop.f32.mrf.mxu0
        %1477 = vdwg.mxu0
        %1478 = vst [vmem:[%s315] sm:$0xff] %v1475
        %p1479 = scmp.eq.s32.totalorder %s21, 7
        // Predicated region
        $region57: #{char_rnn_forward_seq.1} parent=47 // pred_check
          %p1480 = pneg %p1479
        $region58: #{char_rnn_forward_seq.1} parent=47 // pred_check_branch
          %1482 = sbr.rel (%p1480) target = $region60
        $region59: #{char_rnn_forward_seq.1} parent=47 // pred_region
          %v1483 = vld [vmem:[#allocation2] sm:$0xff]
          %v1484 = vld [vmem:[#allocation2 + $0x8] sm:$0xff]
          %1485 = vst [vmem:[%s8] sm:$0xff] %v1483
          %1486 = vst [vmem:[%s8 + $0x8] sm:$0xff] %v1484
        $region60: #{char_rnn_forward_seq.1} parent=47 // pred_fallthru
          _
        %p1487 = scmp.lt.s32.totalorder %s21, 7
        %s1488 = scalar_select %p1487, %s21, 7
        %s1489 = smul.addr %s1488, 8
        %s1490 = scalar_lea.vmem %s7, %s1489
        // Predicated region
        $region61: #{char_rnn_forward_seq.1} parent=47 // pred_check
          %p1491 = pneg %p191
        $region62: #{char_rnn_forward_seq.1} parent=47 // pred_check_branch
          %1493 = sbr.rel (%p1491) target = $region64
        $region63: #{char_rnn_forward_seq.1} parent=47 // pred_region
          _
        $region64: #{char_rnn_forward_seq.1} parent=47 // pred_fallthru
          _
        // Predicated region
        $region65: #{char_rnn_forward_seq.1} parent=47 // pred_check
          %p1494 = pneg %p212
        $region66: #{char_rnn_forward_seq.1} parent=47 // pred_check_branch
          %1496 = sbr.rel (%p1494) target = $region68
        $region67: #{char_rnn_forward_seq.1} parent=47 // pred_region
          _
        $region68: #{char_rnn_forward_seq.1} parent=47 // pred_fallthru
          _
        // Predicated region
        $region69: #{char_rnn_forward_seq.1} parent=47 // pred_check
          %p1497 = pneg %p212
        $region70: #{char_rnn_forward_seq.1} parent=47 // pred_check_branch
          %1499 = sbr.rel (%p1497) target = $region72
        $region71: #{char_rnn_forward_seq.1} parent=47 // pred_region
          _
        $region72: #{char_rnn_forward_seq.1} parent=47 // pred_fallthru
          _
      $region48: #{char_rnn_forward_seq.1} parent=5 // pred_fallthru
        _
      %p1500 = scmp.le.s32.totalorder 2, %s16
      // Predicated region
      $region73: #{char_rnn_forward_seq.1} parent=5 // pred_check
        %p1501 = pneg %p1500
      $region74: #{char_rnn_forward_seq.1} parent=5 // pred_check_branch
        %1503 = sbr.rel (%p1501) target = $region76
      $region75: #{char_rnn_forward_seq.1} parent=5 // pred_region
        %s1504 = ssub.s32 %s16, 2
        // Predicated region
        $region77: #{char_rnn_forward_seq.1} parent=75 // pred_check
          %p1505 = pneg %p197
        $region78: #{char_rnn_forward_seq.1} parent=75 // pred_check_branch
          %1507 = sbr.rel (%p1505) target = $region80
        $region79: #{char_rnn_forward_seq.1} parent=75 // pred_region
          %p1508 = scmp.lt.s32.totalorder %s22, 7
          %s1509 = scalar_select %p1508, %s22, 7
          %s1510 = smul.addr %s1509, 8
          %s1511 = scalar_lea.vmem %s7, %s1510
        $region80: #{char_rnn_forward_seq.1} parent=75 // pred_fallthru
          _
      $region76: #{char_rnn_forward_seq.1} parent=5 // pred_fallthru
        _
    $region6: #{char_rnn_forward_seq.1} parent=1 // loop_footer
      %s20 = sadd.s32 1, %s16
    $region7: #{char_rnn_forward_seq.1} parent=1 // loop_footer_branch
      %15 = sbr.rel target = $region3
    $region8: #{char_rnn_forward_seq.1} parent=1 // loop_exit
      _
    %1512 = vsyncpa [#allocation4], 1
    %s1513 = scalar_lea.sflag [#allocation4], 1
    %1514 = vsyncpa %s1513, 1

</llo_original>
